<compile_context>
chip_gen: v7x
topology: tpu7x:2x2x1
jax: 0.10.0
libtpu: 0.0.40
codegen_flags: <defaults>
</compile_context>

<pallas_src>
import functools

import jax
import jax.numpy as jnp
from jax import lax
from jax.experimental import pallas as pl
from jax.experimental.pallas import tpu as pltpu


def _round_up(v, m):
    return ((v + m - 1) // m) * m


def _vmem_limit_bytes():
    cap = 64 * 1024 * 1024
    try:
        cap = int(pltpu.get_tpu_info().vmem_capacity_bytes)
    except Exception:
        pass
    # ~70% of physical VMEM, clamped to [32 MiB, 100 MiB]:
    #   v5e/v6e (128 MiB) -> ~90 MiB, v7x (64 MiB) -> ~45 MiB.
    return max(32 * 1024 * 1024, min(int(cap * 0.7), 100 * 1024 * 1024))


_VMEM_LIMIT = _vmem_limit_bytes()
_FUSED_MAX_PAD = 256  # use the single-block fully-fused kernel up to this padded size


# ---------------------------------------------------------------------------
# shared in-kernel helpers
# ---------------------------------------------------------------------------
def _masked_attention(h_dst, edge, asrc_row, adst_vec):
    """Node-level attention for a block of destination rows.

    h_dst:   [rows, C]  projected features of the dst rows (f32)
    edge:    [rows, N]  bool, edge[j, i] == True for edge i -> j
    asrc_row:[1, N]     alpha_src per source node
    adst_vec:[1, C]     a_dst attention vector
    returns  [rows, N]  softmax attention weights (rows without in-edges -> all zero)
    """
    a_dst = jnp.sum(h_dst * adst_vec, axis=-1, keepdims=True)        # [rows, 1]
    logits = a_dst + asrc_row                                        # [rows, N]
    logits = jnp.where(logits > 0, logits, 0.2 * logits)             # LeakyReLU(0.2)
    neg = jnp.float32(-1e30)
    logits = jnp.where(edge, logits, neg)
    row_max = jnp.max(logits, axis=-1, keepdims=True)
    p = jnp.where(edge, jnp.exp(logits - row_max), 0.0)
    denom = jnp.sum(p, axis=-1, keepdims=True)
    denom = jnp.where(denom > 0, denom, 1.0)                         # no in-edges -> zero output
    return p * pl.reciprocal(denom, approx=True)


def _masked_log_softmax(x, valid):
    neg = jnp.float32(-1e30)
    lg = jnp.where(valid, x, neg)
    mx = jnp.max(lg, axis=-1, keepdims=True)
    s = jnp.sum(jnp.where(valid, jnp.exp(lg - mx), 0.0), axis=-1, keepdims=True)
    return jnp.where(valid, lg - (mx + jnp.log(s)), 0.0)


# ---------------------------------------------------------------------------
# fully-fused single-block kernel (small graphs: both layers + log_softmax)
# ---------------------------------------------------------------------------
def _han_fused_kernel(x_ref, w1_ref, b1_ref, as1_ref, ad1_ref,
                      w2_ref, b2_ref, as2_ref, ad2_ref,
                      mask_ref, cmask_ref, o_ref):
    edge = mask_ref[...].astype(jnp.float32) > 0.0                   # int8 mask -> bool

    def han_layer(x_bf16, w_ref, b_ref, asrc_ref, adst_ref):
        # Projection (bf16 operands, f32 accumulation on the MXU).
        h = jnp.dot(x_bf16, w_ref[...], preferred_element_type=jnp.float32) + b_ref[...]
        # alpha_src as a lane-dense [1, N] row.
        asrc_row = lax.dot_general(asrc_ref[...], h,
                                   dimension_numbers=(((1,), (1,)), ((), ())),
                                   preferred_element_type=jnp.float32)
        att = _masked_attention(h, edge, asrc_row, adst_ref[...])
        out = jnp.dot(att.astype(jnp.bfloat16), h.astype(jnp.bfloat16),
                      preferred_element_type=jnp.float32)
        return jnp.maximum(out, 0.0)                                 # per-metapath ReLU in HANConv

    h1 = han_layer(x_ref[...], w1_ref, b1_ref, as1_ref, ad1_ref)
    h2 = han_layer(h1.astype(jnp.bfloat16), w2_ref, b2_ref, as2_ref, ad2_ref)
    o_ref[...] = _masked_log_softmax(h2, cmask_ref[...] > 0).astype(o_ref.dtype)


def _han_fused(x_p, w1_p, b1_p, as1_p, ad1_p, w2_p, b2_p, as2_p, ad2_p,
               mask_p, cmask_p):
    n_pad, cin_pad = x_p.shape
    hid_pad = w1_p.shape[1]
    cout_pad = w2_p.shape[1]
    full = lambda shape: pl.BlockSpec(shape, lambda i: (0, 0))
    flops = (2 * n_pad * (cin_pad * hid_pad + hid_pad * cout_pad)
             + 2 * n_pad * n_pad * (hid_pad + cout_pad))
    return pl.pallas_call(
        _han_fused_kernel,
        out_shape=jax.ShapeDtypeStruct((n_pad, cout_pad), jnp.float32),
        grid_spec=pltpu.PrefetchScalarGridSpec(
            num_scalar_prefetch=0,
            grid=(1,),
            in_specs=[full((n_pad, cin_pad)),                        # X            (bf16)
                      full((cin_pad, hid_pad)), full((1, hid_pad)),  # W1, b1
                      full((1, hid_pad)), full((1, hid_pad)),        # a_src1, a_dst1
                      full((hid_pad, cout_pad)), full((1, cout_pad)),  # W2, b2
                      full((1, cout_pad)), full((1, cout_pad)),      # a_src2, a_dst2
                      full((n_pad, n_pad)),                          # edge mask    (int8)
                      full((1, cout_pad))],                          # valid output columns
            out_specs=full((n_pad, cout_pad))),
        compiler_params=pltpu.CompilerParams(
            dimension_semantics=("arbitrary",),
            vmem_limit_bytes=_VMEM_LIMIT),
        cost_estimate=pl.CostEstimate(
            flops=flops,
            transcendentals=2 * n_pad * n_pad + n_pad * cout_pad,
            bytes_accessed=x_p.size * 2 + mask_p.size + n_pad * cout_pad * 4),
    )(x_p, w1_p, b1_p, as1_p, ad1_p, w2_p, b2_p, as2_p, ad2_p, mask_p, cmask_p)


# ---------------------------------------------------------------------------
# tiled two-kernel path (larger graphs): projection kernel + parallel attention kernel
# ---------------------------------------------------------------------------
def _project_kernel(x_ref, w_ref, b_ref, h_ref):
    """H = X @ W + b, emitted directly in bf16 (row-tiled, fully parallel)."""
    h = jnp.dot(x_ref[...], w_ref[...], preferred_element_type=jnp.float32)
    h_ref[...] = (h + b_ref[...]).astype(h_ref.dtype)


def _attention_kernel(h_ref, asrc_ref, adst_ref, mask_ref, cmask_ref, o_ref,
                      *, tile, apply_log_softmax):
    """Node-level attention + aggregation for one dst-row tile (grid axis is 'parallel')."""
    row0 = pl.multiple_of(pl.program_id(0) * tile, tile)
    h_dst = h_ref[pl.ds(row0, tile), :].astype(jnp.float32)          # [tile, C]
    edge = mask_ref[...].astype(jnp.float32) > 0.0                   # [tile, N]

    att = _masked_attention(h_dst, edge, asrc_ref[...], adst_ref[...])
    # Aggregation: att @ H (bf16 operands, f32 accumulation). H stays resident in bf16.
    out = jnp.dot(att.astype(jnp.bfloat16), h_ref[...],
                  preferred_element_type=jnp.float32)                # [tile, C]
    out = jnp.maximum(out, 0.0)                                      # per-metapath ReLU
    if apply_log_softmax:
        out = _masked_log_softmax(out, cmask_ref[...] > 0)
    o_ref[...] = out.astype(o_ref.dtype)


def _han_layer_tiled(x_p, w_p, b_p, asrc_p, adst_p, mask_p, cmask_p, *,
                     apply_log_softmax, out_dtype):
    n_pad, cin_pad = x_p.shape
    c_pad = w_p.shape[1]
    tile = 256 if n_pad % 256 == 0 else 128
    grid = (n_pad // tile,)
    out_size = jnp.dtype(out_dtype).itemsize
    full = lambda shape: pl.BlockSpec(shape, lambda j: (0, 0))

    # --- 1. projection H = X @ W + b  (bf16 output, no O(N^2) resident X) ---
    h = pl.pallas_call(
        _project_kernel,
        out_shape=jax.ShapeDtypeStruct((n_pad, c_pad), jnp.bfloat16),
        grid_spec=pltpu.PrefetchScalarGridSpec(
            num_scalar_prefetch=0,
            grid=grid,
            in_specs=[pl.BlockSpec((tile, cin_pad), lambda i: (i, 0)),
                      full((cin_pad, c_pad)),
                      full((1, c_pad))],
            out_specs=pl.BlockSpec((tile, c_pad), lambda i: (i, 0))),
        compiler_params=pltpu.CompilerParams(
            dimension_semantics=("parallel",),
            vmem_limit_bytes=_VMEM_LIMIT),
        cost_estimate=pl.CostEstimate(
            flops=2 * n_pad * cin_pad * c_pad, transcendentals=0,
            bytes_accessed=x_p.size * 2 + w_p.size * 2 + n_pad * c_pad * 2),
    )(x_p, w_p, b_p)

    # alpha_src as a lane-dense [1, N_pad] row — tiny O(N*C) matvec, plain XLA.
    asrc_row = jnp.dot(h.astype(jnp.float32), asrc_p[0]).reshape(1, n_pad)

    # --- 2. attention + aggregation over dst-row tiles ("parallel" grid) ---
    kernel = functools.partial(_attention_kernel, tile=tile,
                               apply_log_softmax=apply_log_softmax)
    return pl.pallas_call(
        kernel,
        out_shape=jax.ShapeDtypeStruct((n_pad, c_pad), out_dtype),
        grid_spec=pltpu.PrefetchScalarGridSpec(
            num_scalar_prefetch=0,
            grid=grid,
            in_specs=[full((n_pad, c_pad)),                          # H (bf16, resident)
                      full((1, n_pad)),                              # alpha_src row (f32)
                      full((1, c_pad)),                              # a_dst vector (f32)
                      pl.BlockSpec((tile, n_pad), lambda j: (j, 0)),  # edge-mask tile (int8)
                      full((1, c_pad))],                             # valid-column mask (f32)
            out_specs=pl.BlockSpec((tile, c_pad), lambda j: (j, 0))),
        compiler_params=pltpu.CompilerParams(
            dimension_semantics=("parallel",),
            vmem_limit_bytes=_VMEM_LIMIT),
        cost_estimate=pl.CostEstimate(
            flops=2 * n_pad * n_pad * c_pad,
            transcendentals=n_pad * n_pad,
            bytes_accessed=h.size * 2 + mask_p.size + n_pad * c_pad * out_size),
    )(h, asrc_row, adst_p, mask_p, cmask_p)


# ---------------------------------------------------------------------------
# top-level forward
# ---------------------------------------------------------------------------
def _pad2(a, rows, cols, dtype):
    return jnp.zeros((rows, cols), dtype).at[:a.shape[0], :a.shape[1]].set(a.astype(dtype))


@jax.jit
def han_forward(x, edge_index, params):
    """HAN.forward({'node_type': x}, {edge_type: edge_index}) -> log-softmax logits [N, out]."""
    n, cin = x.shape
    hidden = params["w1"].shape[1]
    cout = params["w2"].shape[1]

    n_pad = _round_up(max(n, 1), 128)
    cin_pad = _round_up(max(cin, 1), 128)
    hid_pad = _round_up(max(hidden, 1), 128)
    cout_pad = _round_up(max(cout, 1), 128)

    # Dense edge mask built directly in int8: mask[dst, src] = 1 for every edge src -> dst.
    src, dst = edge_index[0], edge_index[1]
    mask_p = jnp.zeros((n_pad, n_pad), jnp.int8).at[dst, src].set(1)

    x_p = _pad2(x, n_pad, cin_pad, jnp.bfloat16)
    w1_p = _pad2(params["w1"], cin_pad, hid_pad, jnp.bfloat16)
    b1_p = _pad2(params["b1"][None, :], 1, hid_pad, jnp.float32)
    as1_p = _pad2(params["a_src1"], 1, hid_pad, jnp.float32)
    ad1_p = _pad2(params["a_dst1"], 1, hid_pad, jnp.float32)
    w2_p = _pad2(params["w2"], hid_pad, cout_pad, jnp.bfloat16)
    b2_p = _pad2(params["b2"][None, :], 1, cout_pad, jnp.float32)
    as2_p = _pad2(params["a_src2"], 1, cout_pad, jnp.float32)
    ad2_p = _pad2(params["a_dst2"], 1, cout_pad, jnp.float32)
    cm2_p = _pad2(jnp.ones((1, cout), jnp.float32), 1, cout_pad, jnp.float32)

    # NOTE: bias is also added to padded (nonexistent) rows of H; harmless because those
    # rows/columns are masked out of the softmax and aggregation.
    if max(n_pad, cin_pad, hid_pad, cout_pad) <= _FUSED_MAX_PAD:
        # Tiny graphs: one launch, zero intermediate HBM traffic.
        out = _han_fused(x_p, w1_p, b1_p, as1_p, ad1_p,
                         w2_p, b2_p, as2_p, ad2_p, mask_p, cm2_p)
    else:
        cm1_p = _pad2(jnp.ones((1, hidden), jnp.float32), 1, hid_pad, jnp.float32)
        h1 = _han_layer_tiled(x_p, w1_p, b1_p, as1_p, ad1_p, mask_p, cm1_p,
                              apply_log_softmax=False, out_dtype=jnp.bfloat16)
        # F.relu between the convs is the identity here (HANConv output is already ReLU'd);
        # h1 is already bf16 / padded, so layer 2 consumes it with no extra cast pass.
        out = _han_layer_tiled(h1, w2_p, b2_p, as2_p, ad2_p, mask_p, cm2_p,
                               apply_log_softmax=True, out_dtype=jnp.float32)
    return out[:n, :cout]


def _han_reference(x, edge_index, params):
    """Pure-JAX f32 reference (heads=1, single meta-path) for validation."""
    n = x.shape[0]
    src, dst = edge_index[0], edge_index[1]
    adj = jnp.zeros((n, n), jnp.float32).at[dst, src].set(1.0)

    def layer(h_in, w, b, a_s, a_d):
        h = h_in @ w + b
        asrc = jnp.sum(h * a_s, axis=-1)
        adst = jnp.sum(h * a_d, axis=-1)
        logits = adst[:, None] + asrc[None, :]
        logits = jnp.where(logits > 0, logits, 0.2 * logits)
        logits = jnp.where(adj > 0, logits, -jnp.inf)
        att = jax.nn.softmax(logits, axis=-1)
        att = jnp.where(jnp.isnan(att), 0.0, att)
        return jnp.maximum(att @ h, 0.0)

    h1 = layer(x, params["w1"], params["b1"], params["a_src1"], params["a_dst1"])
    h2 = layer(h1, params["w2"], params["b2"], params["a_src2"], params["a_dst2"])
    return jax.nn.log_softmax(h2, axis=-1)


def make_han_params(key, in_channels, hidden, out_channels):
    """Deterministic parameter init mirroring HANConv shapes (glorot weights, zero bias)."""
    def glorot(k, shape):
        fan_in, fan_out = shape[-2], shape[-1]
        lim = (6.0 / (fan_in + fan_out)) ** 0.5
        return jax.random.uniform(k, shape, jnp.float32, -lim, lim)

    ks = jax.random.split(key, 6)
    return {
        "w1": glorot(ks[0], (in_channels, hidden)),
        "b1": jnp.zeros((hidden,), jnp.float32),
        "a_src1": glorot(ks[1], (1, hidden)),
        "a_dst1": glorot(ks[2], (1, hidden)),
        "w2": glorot(ks[3], (hidden, out_channels)),
        "b2": jnp.zeros((out_channels,), jnp.float32),
        "a_src2": glorot(ks[4], (1, out_channels)),
        "a_dst2": glorot(ks[5], (1, out_channels)),
    }


if __name__ == "__main__":
    # Mirrors HAN(in_channels={'node_type': num_nodes}, out_channels=num_nodes,
    #             num_meta_paths=1, metadata=(['node_type'], ['edge_type'])).
    num_nodes = 16
    hidden = 16

    key = jax.random.PRNGKey(0)
    k_feat, k_params = jax.random.split(key)

    # Node features for the single node type: [num_nodes, in_channels=num_nodes].
    x = jax.random.normal(k_feat, (num_nodes, num_nodes), jnp.float32)

    # Single meta-path edge_index [2, E]: directed ring + a few shortcuts.
    ring_src = jnp.arange(num_nodes, dtype=jnp.int32)
    ring_dst = jnp.roll(ring_src, -1)
    extra_src = jnp.array([0, 3, 7, 12], dtype=jnp.int32)
    extra_dst = jnp.array([5, 9, 2, 4], dtype=jnp.int32)
    edge_index = jnp.stack([jnp.concatenate([ring_src, extra_src]),
                            jnp.concatenate([ring_dst, extra_dst])])

    params = make_han_params(k_params, in_channels=num_nodes, hidden=hidden,
                             out_channels=num_nodes)

    # --- actual problem size: single fused kernel, validated against the f32 reference ---
    out = jax.block_until_ready(han_forward(x, edge_index, params))
    assert out.shape == (num_nodes, num_nodes)
    assert out.dtype == jnp.float32
    assert bool(jnp.all(jnp.isfinite(out)))
    ref = _han_reference(x, edge_index, params)
    max_err = float(jnp.max(jnp.abs(out - ref)))
    assert max_err < 0.3, f"max abs error vs f32 reference: {max_err}"

    # --- larger synthetic graph: exercises the tiled / "parallel" two-kernel path ---
    n_big = 300
    kb_feat, kb_params, kb_edges = jax.random.split(jax.random.PRNGKey(1), 3)
    x_big = jax.random.normal(kb_feat, (n_big, n_big), jnp.float32)
    ring = jnp.arange(n_big, dtype=jnp.int32)
    rand_edges = jax.random.randint(kb_edges, (2, 4 * n_big), 0, n_big, dtype=jnp.int32)
    edge_index_big = jnp.concatenate(
        [jnp.stack([ring, jnp.roll(ring, -1)]), rand_edges], axis=1)
    params_big = make_han_params(kb_params, in_channels=n_big, hidden=16,
                                 out_channels=n_big)
    out_big = jax.block_until_ready(han_forward(x_big, edge_index_big, params_big))
    assert out_big.shape == (n_big, n_big)
    assert bool(jnp.all(jnp.isfinite(out_big)))

    print("KERNEL_OK")
</pallas_src>

<mosaic_0001>
module attributes {stable_mosaic.version = 11 : i64} {
  func.func @_han_fused_kernel(%arg0: i32, %arg1: memref<128x128xbf16, #tpu.memory_space<vmem>>, %arg2: memref<128x128xbf16, #tpu.memory_space<vmem>>, %arg3: memref<1x128xf32, #tpu.memory_space<vmem>>, %arg4: memref<1x128xf32, #tpu.memory_space<vmem>>, %arg5: memref<1x128xf32, #tpu.memory_space<vmem>>, %arg6: memref<128x128xbf16, #tpu.memory_space<vmem>>, %arg7: memref<1x128xf32, #tpu.memory_space<vmem>>, %arg8: memref<1x128xf32, #tpu.memory_space<vmem>>, %arg9: memref<1x128xf32, #tpu.memory_space<vmem>>, %arg10: memref<128x128xi8, #tpu.memory_space<vmem>>, %arg11: memref<1x128xf32, #tpu.memory_space<vmem>>, %arg12: memref<128x128xf32, #tpu.memory_space<vmem>>) attributes {dimension_semantics = [#tpu.dimension_semantics<arbitrary>], iteration_bounds = array<i64: 1>, scalar_prefetch = 0 : i64, scratch_operands = 0 : i64, tpu.core_type = #tpu.core_type<tc>, window_params = [{pipeline_mode = #tpu.pipeline_mode<synchronous>, transform_indices = @transform_0, window_bounds = array<i64: 128, 128>}, {pipeline_mode = #tpu.pipeline_mode<synchronous>, transform_indices = @transform_1, window_bounds = array<i64: 128, 128>}, {pipeline_mode = #tpu.pipeline_mode<synchronous>, transform_indices = @transform_2, window_bounds = array<i64: 1, 128>}, {pipeline_mode = #tpu.pipeline_mode<synchronous>, transform_indices = @transform_3, window_bounds = array<i64: 1, 128>}, {pipeline_mode = #tpu.pipeline_mode<synchronous>, transform_indices = @transform_4, window_bounds = array<i64: 1, 128>}, {pipeline_mode = #tpu.pipeline_mode<synchronous>, transform_indices = @transform_5, window_bounds = array<i64: 128, 128>}, {pipeline_mode = #tpu.pipeline_mode<synchronous>, transform_indices = @transform_6, window_bounds = array<i64: 1, 128>}, {pipeline_mode = #tpu.pipeline_mode<synchronous>, transform_indices = @transform_7, window_bounds = array<i64: 1, 128>}, {pipeline_mode = #tpu.pipeline_mode<synchronous>, transform_indices = @transform_8, window_bounds = array<i64: 1, 128>}, {pipeline_mode = #tpu.pipeline_mode<synchronous>, transform_indices = @transform_9, window_bounds = array<i64: 128, 128>}, {pipeline_mode = #tpu.pipeline_mode<synchronous>, transform_indices = @transform_10, window_bounds = array<i64: 1, 128>}, {pipeline_mode = #tpu.pipeline_mode<synchronous>, transform_indices = @transform_11, window_bounds = array<i64: 128, 128>}]} {
    %c0 = arith.constant 0 : index
    %c0_0 = arith.constant 0 : index
    %0 = vector.load %arg10[%c0, %c0_0] : memref<128x128xi8, #tpu.memory_space<vmem>>, vector<128x128xi8>
    %1 = arith.sitofp %0 : vector<128x128xi8> to vector<128x128xf32>
    %cst = arith.constant 0.000000e+00 : f32
    %2 = vector.broadcast %cst : f32 to vector<128x128xf32>
    %3 = arith.cmpf ogt, %1, %2 : vector<128x128xf32>
    %c0_1 = arith.constant 0 : index
    %c0_2 = arith.constant 0 : index
    %4 = vector.load %arg1[%c0_1, %c0_2] : memref<128x128xbf16, #tpu.memory_space<vmem>>, vector<128x128xbf16>
    %c0_3 = arith.constant 0 : index
    %c0_4 = arith.constant 0 : index
    %5 = vector.load %arg2[%c0_3, %c0_4] : memref<128x128xbf16, #tpu.memory_space<vmem>>, vector<128x128xbf16>
    %cst_5 = arith.constant dense<0.000000e+00> : vector<128x128xf32>
    %6 = tpu.matmul %4, %5, %cst_5 {dimension_numbers = #tpu.dot_dimension_numbers<[1], [0], [0], [1], [0, 0, 1, 1], [], []>} : vector<128x128xbf16>, vector<128x128xbf16>, vector<128x128xf32> -> vector<128x128xf32>
    %c0_6 = arith.constant 0 : index
    %c0_7 = arith.constant 0 : index
    %7 = vector.load %arg3[%c0_6, %c0_7] : memref<1x128xf32, #tpu.memory_space<vmem>>, vector<1x128xf32>
    %8 = vector.broadcast %7 : vector<1x128xf32> to vector<128x128xf32>
    %9 = arith.addf %6, %8 : vector<128x128xf32>
    %c0_8 = arith.constant 0 : index
    %c0_9 = arith.constant 0 : index
    %10 = vector.load %arg4[%c0_8, %c0_9] : memref<1x128xf32, #tpu.memory_space<vmem>>, vector<1x128xf32>
    %cst_10 = arith.constant dense<0.000000e+00> : vector<1x128xf32>
    %11 = tpu.matmul %10, %9, %cst_10 {dimension_numbers = #tpu.dot_dimension_numbers<[1], [1], [0], [0], [0, 0, 1, 0], [], []>} : vector<1x128xf32>, vector<128x128xf32>, vector<1x128xf32> -> vector<1x128xf32>
    %c0_11 = arith.constant 0 : index
    %c0_12 = arith.constant 0 : index
    %12 = vector.load %arg5[%c0_11, %c0_12] : memref<1x128xf32, #tpu.memory_space<vmem>>, vector<1x128xf32>
    %13 = vector.broadcast %12 : vector<1x128xf32> to vector<128x128xf32>
    %14 = arith.mulf %9, %13 : vector<128x128xf32>
    %cst_13 = arith.constant dense<0.000000e+00> : vector<128xf32>
    %15 = vector.multi_reduction <add>, %14, %cst_13 [1] : vector<128x128xf32> to vector<128xf32>
    %16 = vector.shape_cast %15 : vector<128xf32> to vector<128x1xf32>
    %17 = vector.broadcast %16 : vector<128x1xf32> to vector<128x128xf32>
    %18 = vector.broadcast %11 : vector<1x128xf32> to vector<128x128xf32>
    %19 = arith.addf %17, %18 : vector<128x128xf32>
    %cst_14 = arith.constant 0.000000e+00 : f32
    %20 = vector.broadcast %cst_14 : f32 to vector<128x128xf32>
    %21 = arith.cmpf ogt, %19, %20 : vector<128x128xf32>
    %cst_15 = arith.constant 2.000000e-01 : f32
    %22 = vector.broadcast %cst_15 : f32 to vector<128x128xf32>
    %23 = arith.mulf %22, %19 : vector<128x128xf32>
    %24 = arith.select %21, %19, %23 : vector<128x128xi1>, vector<128x128xf32>
    %cst_16 = arith.constant -1.000000e+30 : f32
    %25 = vector.broadcast %cst_16 : f32 to vector<128x128xf32>
    %26 = arith.select %3, %24, %25 : vector<128x128xi1>, vector<128x128xf32>
    %cst_17 = arith.constant dense<0xFF800000> : vector<128xf32>
    %27 = vector.multi_reduction <maximumf>, %26, %cst_17 [1] : vector<128x128xf32> to vector<128xf32>
    %28 = vector.shape_cast %27 : vector<128xf32> to vector<128x1xf32>
    %29 = vector.broadcast %28 : vector<128x1xf32> to vector<128x128xf32>
    %30 = arith.subf %26, %29 : vector<128x128xf32>
    %31 = math.exp %30 : vector<128x128xf32>
    %cst_18 = arith.constant 0.000000e+00 : f32
    %32 = vector.broadcast %cst_18 : f32 to vector<128x128xf32>
    %33 = arith.select %3, %31, %32 : vector<128x128xi1>, vector<128x128xf32>
    %cst_19 = arith.constant dense<0.000000e+00> : vector<128xf32>
    %34 = vector.multi_reduction <add>, %33, %cst_19 [1] : vector<128x128xf32> to vector<128xf32>
    %35 = vector.shape_cast %34 : vector<128xf32> to vector<128x1xf32>
    %cst_20 = arith.constant 0.000000e+00 : f32
    %36 = vector.broadcast %cst_20 : f32 to vector<128x1xf32>
    %37 = arith.cmpf ogt, %35, %36 : vector<128x1xf32>
    %cst_21 = arith.constant 1.000000e+00 : f32
    %38 = vector.broadcast %cst_21 : f32 to vector<128x1xf32>
    %39 = arith.select %37, %35, %38 : vector<128x1xi1>, vector<128x1xf32>
    %40 = tpu.reciprocal %39 {approx = true} : vector<128x1xf32> -> vector<128x1xf32>
    %41 = vector.broadcast %40 : vector<128x1xf32> to vector<128x128xf32>
    %42 = arith.mulf %33, %41 : vector<128x128xf32>
    %43 = arith.truncf %42 : vector<128x128xf32> to vector<128x128xbf16>
    %44 = arith.truncf %9 : vector<128x128xf32> to vector<128x128xbf16>
    %cst_22 = arith.constant dense<0.000000e+00> : vector<128x128xf32>
    %45 = tpu.matmul %43, %44, %cst_22 {dimension_numbers = #tpu.dot_dimension_numbers<[1], [0], [0], [1], [0, 0, 1, 1], [], []>} : vector<128x128xbf16>, vector<128x128xbf16>, vector<128x128xf32> -> vector<128x128xf32>
    %cst_23 = arith.constant 0.000000e+00 : f32
    %46 = vector.broadcast %cst_23 : f32 to vector<128x128xf32>
    %47 = arith.maximumf %45, %46 : vector<128x128xf32>
    %48 = arith.truncf %47 : vector<128x128xf32> to vector<128x128xbf16>
    %c0_24 = arith.constant 0 : index
    %c0_25 = arith.constant 0 : index
    %49 = vector.load %arg6[%c0_24, %c0_25] : memref<128x128xbf16, #tpu.memory_space<vmem>>, vector<128x128xbf16>
    %cst_26 = arith.constant dense<0.000000e+00> : vector<128x128xf32>
    %50 = tpu.matmul %48, %49, %cst_26 {dimension_numbers = #tpu.dot_dimension_numbers<[1], [0], [0], [1], [0, 0, 1, 1], [], []>} : vector<128x128xbf16>, vector<128x128xbf16>, vector<128x128xf32> -> vector<128x128xf32>
    %c0_27 = arith.constant 0 : index
    %c0_28 = arith.constant 0 : index
    %51 = vector.load %arg7[%c0_27, %c0_28] : memref<1x128xf32, #tpu.memory_space<vmem>>, vector<1x128xf32>
    %52 = vector.broadcast %51 : vector<1x128xf32> to vector<128x128xf32>
    %53 = arith.addf %50, %52 : vector<128x128xf32>
    %c0_29 = arith.constant 0 : index
    %c0_30 = arith.constant 0 : index
    %54 = vector.load %arg8[%c0_29, %c0_30] : memref<1x128xf32, #tpu.memory_space<vmem>>, vector<1x128xf32>
    %cst_31 = arith.constant dense<0.000000e+00> : vector<1x128xf32>
    %55 = tpu.matmul %54, %53, %cst_31 {dimension_numbers = #tpu.dot_dimension_numbers<[1], [1], [0], [0], [0, 0, 1, 0], [], []>} : vector<1x128xf32>, vector<128x128xf32>, vector<1x128xf32> -> vector<1x128xf32>
    %c0_32 = arith.constant 0 : index
    %c0_33 = arith.constant 0 : index
    %56 = vector.load %arg9[%c0_32, %c0_33] : memref<1x128xf32, #tpu.memory_space<vmem>>, vector<1x128xf32>
    %57 = vector.broadcast %56 : vector<1x128xf32> to vector<128x128xf32>
    %58 = arith.mulf %53, %57 : vector<128x128xf32>
    %cst_34 = arith.constant dense<0.000000e+00> : vector<128xf32>
    %59 = vector.multi_reduction <add>, %58, %cst_34 [1] : vector<128x128xf32> to vector<128xf32>
    %60 = vector.shape_cast %59 : vector<128xf32> to vector<128x1xf32>
    %61 = vector.broadcast %60 : vector<128x1xf32> to vector<128x128xf32>
    %62 = vector.broadcast %55 : vector<1x128xf32> to vector<128x128xf32>
    %63 = arith.addf %61, %62 : vector<128x128xf32>
    %cst_35 = arith.constant 0.000000e+00 : f32
    %64 = vector.broadcast %cst_35 : f32 to vector<128x128xf32>
    %65 = arith.cmpf ogt, %63, %64 : vector<128x128xf32>
    %cst_36 = arith.constant 2.000000e-01 : f32
    %66 = vector.broadcast %cst_36 : f32 to vector<128x128xf32>
    %67 = arith.mulf %66, %63 : vector<128x128xf32>
    %68 = arith.select %65, %63, %67 : vector<128x128xi1>, vector<128x128xf32>
    %cst_37 = arith.constant -1.000000e+30 : f32
    %69 = vector.broadcast %cst_37 : f32 to vector<128x128xf32>
    %70 = arith.select %3, %68, %69 : vector<128x128xi1>, vector<128x128xf32>
    %cst_38 = arith.constant dense<0xFF800000> : vector<128xf32>
    %71 = vector.multi_reduction <maximumf>, %70, %cst_38 [1] : vector<128x128xf32> to vector<128xf32>
    %72 = vector.shape_cast %71 : vector<128xf32> to vector<128x1xf32>
    %73 = vector.broadcast %72 : vector<128x1xf32> to vector<128x128xf32>
    %74 = arith.subf %70, %73 : vector<128x128xf32>
    %75 = math.exp %74 : vector<128x128xf32>
    %cst_39 = arith.constant 0.000000e+00 : f32
    %76 = vector.broadcast %cst_39 : f32 to vector<128x128xf32>
    %77 = arith.select %3, %75, %76 : vector<128x128xi1>, vector<128x128xf32>
    %cst_40 = arith.constant dense<0.000000e+00> : vector<128xf32>
    %78 = vector.multi_reduction <add>, %77, %cst_40 [1] : vector<128x128xf32> to vector<128xf32>
    %79 = vector.shape_cast %78 : vector<128xf32> to vector<128x1xf32>
    %cst_41 = arith.constant 0.000000e+00 : f32
    %80 = vector.broadcast %cst_41 : f32 to vector<128x1xf32>
    %81 = arith.cmpf ogt, %79, %80 : vector<128x1xf32>
    %cst_42 = arith.constant 1.000000e+00 : f32
    %82 = vector.broadcast %cst_42 : f32 to vector<128x1xf32>
    %83 = arith.select %81, %79, %82 : vector<128x1xi1>, vector<128x1xf32>
    %84 = tpu.reciprocal %83 {approx = true} : vector<128x1xf32> -> vector<128x1xf32>
    %85 = vector.broadcast %84 : vector<128x1xf32> to vector<128x128xf32>
    %86 = arith.mulf %77, %85 : vector<128x128xf32>
    %87 = arith.truncf %86 : vector<128x128xf32> to vector<128x128xbf16>
    %88 = arith.truncf %53 : vector<128x128xf32> to vector<128x128xbf16>
    %cst_43 = arith.constant dense<0.000000e+00> : vector<128x128xf32>
    %89 = tpu.matmul %87, %88, %cst_43 {dimension_numbers = #tpu.dot_dimension_numbers<[1], [0], [0], [1], [0, 0, 1, 1], [], []>} : vector<128x128xbf16>, vector<128x128xbf16>, vector<128x128xf32> -> vector<128x128xf32>
    %cst_44 = arith.constant 0.000000e+00 : f32
    %90 = vector.broadcast %cst_44 : f32 to vector<128x128xf32>
    %91 = arith.maximumf %89, %90 : vector<128x128xf32>
    %c0_45 = arith.constant 0 : index
    %c0_46 = arith.constant 0 : index
    %92 = vector.load %arg11[%c0_45, %c0_46] : memref<1x128xf32, #tpu.memory_space<vmem>>, vector<1x128xf32>
    %cst_47 = arith.constant 0.000000e+00 : f32
    %93 = vector.broadcast %cst_47 : f32 to vector<1x128xf32>
    %94 = arith.cmpf ogt, %92, %93 : vector<1x128xf32>
    %cst_48 = arith.constant -1.000000e+30 : f32
    %95 = vector.shape_cast %94 : vector<1x128xi1> to vector<1x128xi1>
    %96 = vector.broadcast %95 : vector<1x128xi1> to vector<128x128xi1>
    %97 = vector.broadcast %cst_48 : f32 to vector<128x128xf32>
    %98 = arith.select %96, %91, %97 : vector<128x128xi1>, vector<128x128xf32>
    %cst_49 = arith.constant dense<0xFF800000> : vector<128xf32>
    %99 = vector.multi_reduction <maximumf>, %98, %cst_49 [1] : vector<128x128xf32> to vector<128xf32>
    %100 = vector.shape_cast %99 : vector<128xf32> to vector<128x1xf32>
    %101 = vector.broadcast %100 : vector<128x1xf32> to vector<128x128xf32>
    %102 = arith.subf %98, %101 : vector<128x128xf32>
    %103 = math.exp %102 : vector<128x128xf32>
    %cst_50 = arith.constant 0.000000e+00 : f32
    %104 = vector.shape_cast %94 : vector<1x128xi1> to vector<1x128xi1>
    %105 = vector.broadcast %104 : vector<1x128xi1> to vector<128x128xi1>
    %106 = vector.broadcast %cst_50 : f32 to vector<128x128xf32>
    %107 = arith.select %105, %103, %106 : vector<128x128xi1>, vector<128x128xf32>
    %cst_51 = arith.constant dense<0.000000e+00> : vector<128xf32>
    %108 = vector.multi_reduction <add>, %107, %cst_51 [1] : vector<128x128xf32> to vector<128xf32>
    %109 = vector.shape_cast %108 : vector<128xf32> to vector<128x1xf32>
    %110 = math.log %109 : vector<128x1xf32>
    %111 = arith.addf %100, %110 : vector<128x1xf32>
    %112 = vector.broadcast %111 : vector<128x1xf32> to vector<128x128xf32>
    %113 = arith.subf %98, %112 : vector<128x128xf32>
    %cst_52 = arith.constant 0.000000e+00 : f32
    %114 = vector.shape_cast %94 : vector<1x128xi1> to vector<1x128xi1>
    %115 = vector.broadcast %114 : vector<1x128xi1> to vector<128x128xi1>
    %116 = vector.broadcast %cst_52 : f32 to vector<128x128xf32>
    %117 = arith.select %115, %113, %116 : vector<128x128xi1>, vector<128x128xf32>
    %c0_53 = arith.constant 0 : index
    %c0_54 = arith.constant 0 : index
    %118 = vector.load %arg12[%c0_53, %c0_54] : memref<128x128xf32, #tpu.memory_space<vmem>>, vector<128x128xf32>
    tpu.vector_store %arg12[%c0_53, %c0_54], %117 {strides = array<i32>} : memref<128x128xf32, #tpu.memory_space<vmem>>, vector<128x128xf32>,
    return
  }
  func.func @transform_0(%arg0: i32) -> (i32, i32) {
    %c0_i32 = arith.constant 0 : i32
    %c0_i32_0 = arith.constant 0 : i32
    %c0_i32_1 = arith.constant 0 : i32
    return %c0_i32, %c0_i32_0 : i32, i32
  }
  func.func @transform_1(%arg0: i32) -> (i32, i32) {
    %c0_i32 = arith.constant 0 : i32
    %c0_i32_0 = arith.constant 0 : i32
    %c0_i32_1 = arith.constant 0 : i32
    return %c0_i32, %c0_i32_0 : i32, i32
  }
  func.func @transform_2(%arg0: i32) -> (i32, i32) {
    %c0_i32 = arith.constant 0 : i32
    %c0_i32_0 = arith.constant 0 : i32
    %c0_i32_1 = arith.constant 0 : i32
    return %c0_i32, %c0_i32_0 : i32, i32
  }
  func.func @transform_3(%arg0: i32) -> (i32, i32) {
    %c0_i32 = arith.constant 0 : i32
    %c0_i32_0 = arith.constant 0 : i32
    %c0_i32_1 = arith.constant 0 : i32
    return %c0_i32, %c0_i32_0 : i32, i32
  }
  func.func @transform_4(%arg0: i32) -> (i32, i32) {
    %c0_i32 = arith.constant 0 : i32
    %c0_i32_0 = arith.constant 0 : i32
    %c0_i32_1 = arith.constant 0 : i32
    return %c0_i32, %c0_i32_0 : i32, i32
  }
  func.func @transform_5(%arg0: i32) -> (i32, i32) {
    %c0_i32 = arith.constant 0 : i32
    %c0_i32_0 = arith.constant 0 : i32
    %c0_i32_1 = arith.constant 0 : i32
    return %c0_i32, %c0_i32_0 : i32, i32
  }
  func.func @transform_6(%arg0: i32) -> (i32, i32) {
    %c0_i32 = arith.constant 0 : i32
    %c0_i32_0 = arith.constant 0 : i32
    %c0_i32_1 = arith.constant 0 : i32
    return %c0_i32, %c0_i32_0 : i32, i32
  }
  func.func @transform_7(%arg0: i32) -> (i32, i32) {
    %c0_i32 = arith.constant 0 : i32
    %c0_i32_0 = arith.constant 0 : i32
    %c0_i32_1 = arith.constant 0 : i32
    return %c0_i32, %c0_i32_0 : i32, i32
  }
  func.func @transform_8(%arg0: i32) -> (i32, i32) {
    %c0_i32 = arith.constant 0 : i32
    %c0_i32_0 = arith.constant 0 : i32
    %c0_i32_1 = arith.constant 0 : i32
    return %c0_i32, %c0_i32_0 : i32, i32
  }
  func.func @transform_9(%arg0: i32) -> (i32, i32) {
    %c0_i32 = arith.constant 0 : i32
    %c0_i32_0 = arith.constant 0 : i32
    %c0_i32_1 = arith.constant 0 : i32
    return %c0_i32, %c0_i32_0 : i32, i32
  }
  func.func @transform_10(%arg0: i32) -> (i32, i32) {
    %c0_i32 = arith.constant 0 : i32
    %c0_i32_0 = arith.constant 0 : i32
    %c0_i32_1 = arith.constant 0 : i32
    return %c0_i32, %c0_i32_0 : i32, i32
  }
  func.func @transform_11(%arg0: i32) -> (i32, i32) {
    %c0_i32 = arith.constant 0 : i32
    %c0_i32_0 = arith.constant 0 : i32
    %c0_i32_1 = arith.constant 0 : i32
    return %c0_i32, %c0_i32_0 : i32, i32
  }
}

</mosaic_0001>

<llo_original>
// kernel: han_forward.1
$region0: #{han_forward.1}
  #allocation0 [shape = 'u32[]', space=smem, size = 0x4, offset = 0x4, fixed_abs, tag = 'smem constant byte address 0x4 - core index']
  #allocation1 [shape = 'u32[144,128]{1,0:T(1,128)}', space=vmem, size = 0x12000, scoped, tag = 'internal scratch']
  %s0 = inlined_call_operand.vmem [shape: bf16[128,128], index: 0, kind: input, shape index: {}]
  %s1 = inlined_call_operand.vmem [shape: bf16[128,128], index: 1, kind: input, shape index: {}]
  %s2 = inlined_call_operand.vmem [shape: f32[1,128], index: 2, kind: input, shape index: {}]
  %s3 = inlined_call_operand.vmem [shape: f32[1,128], index: 3, kind: input, shape index: {}]
  %s4 = inlined_call_operand.vmem [shape: f32[1,128], index: 4, kind: input, shape index: {}]
  %s5 = inlined_call_operand.vmem [shape: bf16[128,128], index: 5, kind: input, shape index: {}]
  %s6 = inlined_call_operand.vmem [shape: f32[1,128], index: 6, kind: input, shape index: {}]
  %s7 = inlined_call_operand.vmem [shape: f32[1,128], index: 7, kind: input, shape index: {}]
  %s8 = inlined_call_operand.vmem [shape: f32[1,128], index: 8, kind: input, shape index: {}]
  %s9 = inlined_call_operand.vmem [shape: s8[128,128], index: 9, kind: input, shape index: {}]
  %s10 = inlined_call_operand.vmem [shape: f32[1,128], index: 10, kind: input, shape index: {}]
  %s11 = inlined_call_operand.vmem [shape: f32[128,128], index: 11, kind: output, shape index: {}]
  %s12 = sld [smem:[#allocation0]]
  $region54: #{han_forward.1} parent=0
    _
  %s14 = ssub.s32 1, %s12
  %s15 = scalar_select 0, %s14, %s12
  // Predicated region
  $region2: #{han_forward.1} parent=0 // pred_check
    _
  $region3: #{han_forward.1} parent=0 // pred_check_branch
    %17 = sbr.rel (0) target = $region5
  $region4: #{han_forward.1} parent=0 // pred_region
    _
  $region5: #{han_forward.1} parent=0 // pred_fallthru
    _
  // Predicated region
  $region6: #{han_forward.1} parent=0 // pred_check
    _
  $region7: #{han_forward.1} parent=0 // pred_check_branch
    %19 = sbr.rel (0) target = $region9
  $region8: #{han_forward.1} parent=0 // pred_region
    _
  $region9: #{han_forward.1} parent=0 // pred_fallthru
    _
  // Predicated region
  $region10: #{han_forward.1} parent=0 // pred_check
    _
  $region11: #{han_forward.1} parent=0 // pred_check_branch
    %21 = sbr.rel (0) target = $region13
  $region12: #{han_forward.1} parent=0 // pred_region
    _
  $region13: #{han_forward.1} parent=0 // pred_fallthru
    _
  // Predicated region
  $region14: #{han_forward.1} parent=0 // pred_check
    _
  $region15: #{han_forward.1} parent=0 // pred_check_branch
    %23 = sbr.rel (0) target = $region17
  $region16: #{han_forward.1} parent=0 // pred_region
    _
  $region17: #{han_forward.1} parent=0 // pred_fallthru
    _
  // Predicated region
  $region18: #{han_forward.1} parent=0 // pred_check
    _
  $region19: #{han_forward.1} parent=0 // pred_check_branch
    %25 = sbr.rel (0) target = $region21
  $region20: #{han_forward.1} parent=0 // pred_region
    _
  $region21: #{han_forward.1} parent=0 // pred_fallthru
    _
  // Predicated region
  $region22: #{han_forward.1} parent=0 // pred_check
    _
  $region23: #{han_forward.1} parent=0 // pred_check_branch
    %27 = sbr.rel (0) target = $region25
  $region24: #{han_forward.1} parent=0 // pred_region
    _
  $region25: #{han_forward.1} parent=0 // pred_fallthru
    _
  // Predicated region
  $region26: #{han_forward.1} parent=0 // pred_check
    _
  $region27: #{han_forward.1} parent=0 // pred_check_branch
    %29 = sbr.rel (0) target = $region29
  $region28: #{han_forward.1} parent=0 // pred_region
    _
  $region29: #{han_forward.1} parent=0 // pred_fallthru
    _
  // Predicated region
  $region30: #{han_forward.1} parent=0 // pred_check
    _
  $region31: #{han_forward.1} parent=0 // pred_check_branch
    %31 = sbr.rel (0) target = $region33
  $region32: #{han_forward.1} parent=0 // pred_region
    _
  $region33: #{han_forward.1} parent=0 // pred_fallthru
    _
  // Predicated region
  $region34: #{han_forward.1} parent=0 // pred_check
    _
  $region35: #{han_forward.1} parent=0 // pred_check_branch
    %33 = sbr.rel (0) target = $region37
  $region36: #{han_forward.1} parent=0 // pred_region
    _
  $region37: #{han_forward.1} parent=0 // pred_fallthru
    _
  // Predicated region
  $region38: #{han_forward.1} parent=0 // pred_check
    _
  $region39: #{han_forward.1} parent=0 // pred_check_branch
    %35 = sbr.rel (0) target = $region41
  $region40: #{han_forward.1} parent=0 // pred_region
    _
  $region41: #{han_forward.1} parent=0 // pred_fallthru
    _
  // Predicated region
  $region42: #{han_forward.1} parent=0 // pred_check
    _
  $region43: #{han_forward.1} parent=0 // pred_check_branch
    %37 = sbr.rel (0) target = $region45
  $region44: #{han_forward.1} parent=0 // pred_region
    _
  $region45: #{han_forward.1} parent=0 // pred_fallthru
    _
  %v39 = vld [vmem:[%s9] sm:$0x3]
  %v40 = vld [vmem:[%s9 + $0x2] sm:$0x3]
  %v41 = vld [vmem:[%s9 + $0x4] sm:$0x3]
  %v42 = vld [vmem:[%s9 + $0x6] sm:$0x3]
  %v43 = vld [vmem:[%s9 + $0x8] sm:$0x3]
  %v44 = vld [vmem:[%s9 + $0xa] sm:$0x3]
  %v45 = vld [vmem:[%s9 + $0xc] sm:$0x3]
  %v46 = vld [vmem:[%s9 + $0xe] sm:$0x3]
  %v47 = vld [vmem:[%s9 + $0x10] sm:$0x3]
  %v48 = vld [vmem:[%s9 + $0x12] sm:$0x3]
  %v49 = vld [vmem:[%s9 + $0x14] sm:$0x3]
  %v50 = vld [vmem:[%s9 + $0x16] sm:$0x3]
  %v51 = vld [vmem:[%s9 + $0x18] sm:$0x3]
  %v52 = vld [vmem:[%s9 + $0x1a] sm:$0x3]
  %v53 = vld [vmem:[%s9 + $0x1c] sm:$0x3]
  %v54 = vld [vmem:[%s9 + $0x1e] sm:$0x3]
  %v55 = vunpack.c.0.s8 %v39
  %v56 = vunpack.c.0.s8 %v40
  %v57 = vunpack.c.0.s8 %v41
  %v58 = vunpack.c.0.s8 %v42
  %v59 = vunpack.c.0.s8 %v43
  %v60 = vunpack.c.0.s8 %v44
  %v61 = vunpack.c.0.s8 %v45
  %v62 = vunpack.c.0.s8 %v46
  %v63 = vunpack.c.0.s8 %v47
  %v64 = vunpack.c.0.s8 %v48
  %v65 = vunpack.c.0.s8 %v49
  %v66 = vunpack.c.0.s8 %v50
  %v67 = vunpack.c.0.s8 %v51
  %v68 = vunpack.c.0.s8 %v52
  %v69 = vunpack.c.0.s8 %v53
  %v70 = vunpack.c.0.s8 %v54
  %v71 = vcvt.s32.f32 %v55
  %v72 = vcvt.s32.f32 %v56
  %v73 = vcvt.s32.f32 %v57
  %v74 = vcvt.s32.f32 %v58
  %v75 = vcvt.s32.f32 %v59
  %v76 = vcvt.s32.f32 %v60
  %v77 = vcvt.s32.f32 %v61
  %v78 = vcvt.s32.f32 %v62
  %v79 = vcvt.s32.f32 %v63
  %v80 = vcvt.s32.f32 %v64
  %v81 = vcvt.s32.f32 %v65
  %v82 = vcvt.s32.f32 %v66
  %v83 = vcvt.s32.f32 %v67
  %v84 = vcvt.s32.f32 %v68
  %v85 = vcvt.s32.f32 %v69
  %v86 = vcvt.s32.f32 %v70
  %vm87 = vcmp.gt.f32.partialorder %v71, 0.0
  %vm88 = vcmp.gt.f32.partialorder %v72, 0.0
  %vm89 = vcmp.gt.f32.partialorder %v73, 0.0
  %vm90 = vcmp.gt.f32.partialorder %v74, 0.0
  %vm91 = vcmp.gt.f32.partialorder %v75, 0.0
  %vm92 = vcmp.gt.f32.partialorder %v76, 0.0
  %vm93 = vcmp.gt.f32.partialorder %v77, 0.0
  %vm94 = vcmp.gt.f32.partialorder %v78, 0.0
  %vm95 = vcmp.gt.f32.partialorder %v79, 0.0
  %vm96 = vcmp.gt.f32.partialorder %v80, 0.0
  %vm97 = vcmp.gt.f32.partialorder %v81, 0.0
  %vm98 = vcmp.gt.f32.partialorder %v82, 0.0
  %vm99 = vcmp.gt.f32.partialorder %v83, 0.0
  %vm100 = vcmp.gt.f32.partialorder %v84, 0.0
  %vm101 = vcmp.gt.f32.partialorder %v85, 0.0
  %vm102 = vcmp.gt.f32.partialorder %v86, 0.0
  %v103 = vld [vmem:[%s0] sm:$0xf]
  %v104 = vld [vmem:[%s0 + $0x4] sm:$0xf]
  %v105 = vld [vmem:[%s0 + $0x8] sm:$0xf]
  %v106 = vld [vmem:[%s0 + $0xc] sm:$0xf]
  %v107 = vld [vmem:[%s0 + $0x10] sm:$0xf]
  %v108 = vld [vmem:[%s0 + $0x14] sm:$0xf]
  %v109 = vld [vmem:[%s0 + $0x18] sm:$0xf]
  %v110 = vld [vmem:[%s0 + $0x1c] sm:$0xf]
  %v111 = vld [vmem:[%s0 + $0x20] sm:$0xf]
  %v112 = vld [vmem:[%s0 + $0x24] sm:$0xf]
  %v113 = vld [vmem:[%s0 + $0x28] sm:$0xf]
  %v114 = vld [vmem:[%s0 + $0x2c] sm:$0xf]
  %v115 = vld [vmem:[%s0 + $0x30] sm:$0xf]
  %v116 = vld [vmem:[%s0 + $0x34] sm:$0xf]
  %v117 = vld [vmem:[%s0 + $0x38] sm:$0xf]
  %v118 = vld [vmem:[%s0 + $0x3c] sm:$0xf]
  %v119 = vld [vmem:[%s1] sm:$0xf]
  %v120 = vld [vmem:[%s1 + $0x4] sm:$0xf]
  %v121 = vld [vmem:[%s1 + $0x8] sm:$0xf]
  %v122 = vld [vmem:[%s1 + $0xc] sm:$0xf]
  %v123 = vld [vmem:[%s1 + $0x10] sm:$0xf]
  %v124 = vld [vmem:[%s1 + $0x14] sm:$0xf]
  %v125 = vld [vmem:[%s1 + $0x18] sm:$0xf]
  %v126 = vld [vmem:[%s1 + $0x1c] sm:$0xf]
  %v127 = vld [vmem:[%s1 + $0x20] sm:$0xf]
  %v128 = vld [vmem:[%s1 + $0x24] sm:$0xf]
  %v129 = vld [vmem:[%s1 + $0x28] sm:$0xf]
  %v130 = vld [vmem:[%s1 + $0x2c] sm:$0xf]
  %v131 = vld [vmem:[%s1 + $0x30] sm:$0xf]
  %v132 = vld [vmem:[%s1 + $0x34] sm:$0xf]
  %v133 = vld [vmem:[%s1 + $0x38] sm:$0xf]
  %v134 = vld [vmem:[%s1 + $0x3c] sm:$0xf]
  %v135 = vld [vmem:[%s2] sm:$0x1]
  %v137 = vlaneseq
  %v138 = vshrl.u32 %v137, 7
  %v139 = vsub.s32 0, %v138
  %v140 = vrot.slane %v135, %v139
  %v158 = vunpack.c.l.b16 %v103
  %v159 = vunpack.c.l.b16 %v104
  %v160 = vunpack.c.l.b16 %v105
  %v161 = vunpack.c.l.b16 %v106
  %v162 = vunpack.c.l.b16 %v107
  %v163 = vunpack.c.l.b16 %v108
  %v164 = vunpack.c.l.b16 %v109
  %v165 = vunpack.c.l.b16 %v110
  %v166 = vunpack.c.l.b16 %v111
  %v167 = vunpack.c.l.b16 %v112
  %v168 = vunpack.c.l.b16 %v113
  %v169 = vunpack.c.l.b16 %v114
  %v170 = vunpack.c.l.b16 %v115
  %v171 = vunpack.c.l.b16 %v116
  %v172 = vunpack.c.l.b16 %v117
  %v173 = vunpack.c.l.b16 %v118
  %v174 = vpack.c.b16 %v159, %v158
  %v175 = vpack.c.b16 %v161, %v160
  %v176 = vpack.c.b16 %v163, %v162
  %v177 = vpack.c.b16 %v165, %v164
  %v178 = vpack.c.b16 %v167, %v166
  %v179 = vpack.c.b16 %v169, %v168
  %v180 = vpack.c.b16 %v171, %v170
  %v181 = vpack.c.b16 %v173, %v172
  %v206 = vunpack.c.l.b16 %v119
  %v207 = vunpack.c.l.b16 %v120
  %v208 = vunpack.c.l.b16 %v121
  %v209 = vunpack.c.l.b16 %v122
  %v210 = vunpack.c.l.b16 %v123
  %v211 = vunpack.c.l.b16 %v124
  %v212 = vunpack.c.l.b16 %v125
  %v213 = vunpack.c.l.b16 %v126
  %v214 = vunpack.c.l.b16 %v127
  %v215 = vunpack.c.l.b16 %v128
  %v216 = vunpack.c.l.b16 %v129
  %v217 = vunpack.c.l.b16 %v130
  %v218 = vunpack.c.l.b16 %v131
  %v219 = vunpack.c.l.b16 %v132
  %v220 = vunpack.c.l.b16 %v133
  %v221 = vunpack.c.l.b16 %v134
  %v222 = vpack.c.b16 %v207, %v206
  %v223 = vpack.c.b16 %v209, %v208
  %v224 = vpack.c.b16 %v211, %v210
  %v225 = vpack.c.b16 %v213, %v212
  %v226 = vpack.c.b16 %v215, %v214
  %v227 = vpack.c.b16 %v217, %v216
  %v228 = vpack.c.b16 %v219, %v218
  %v229 = vpack.c.b16 %v221, %v220
  %238 = vmatprep.subr.bf16.mxu0 0
  %239 = vmatpush1.bf16.msra.mxu0 %v222
  %240 = vmatprep.subr.bf16.mxu0 0
  %241 = vmatpush1.bf16.msra.mxu0 %v223
  %242 = vmatprep.subr.bf16.mxu0 0
  %243 = vmatpush1.bf16.msra.mxu0 %v224
  %244 = vmatprep.subr.bf16.mxu0 0
  %245 = vmatpush1.bf16.msra.mxu0 %v225
  %246 = vmatprep.subr.bf16.mxu0 0
  %247 = vmatpush1.bf16.msra.mxu0 %v226
  %248 = vmatprep.subr.bf16.mxu0 0
  %249 = vmatpush1.bf16.msra.mxu0 %v227
  %250 = vmatprep.subr.bf16.mxu0 0
  %251 = vmatpush1.bf16.msra.mxu0 %v228
  %252 = vmatprep.subr.bf16.mxu0 0
  %253 = vmatpush1.bf16.msra.mxu0 %v229
  %254 = vmatprep.subr.bf16.mxu0 0
  %255 = vmatpush1.bf16.msra.mxu0 0
  %256 = vmatprep.subr.bf16.mxu0 0
  %257 = vmatpush1.bf16.msra.mxu0 0
  %258 = vmatprep.subr.bf16.mxu0 0
  %259 = vmatpush1.bf16.msra.mxu0 0
  %260 = vmatprep.subr.bf16.mxu0 0
  %261 = vmatpush1.bf16.msra.mxu0 0
  %262 = vmatprep.subr.bf16.mxu0 0
  %263 = vmatpush1.bf16.msra.mxu0 0
  %264 = vmatprep.subr.bf16.mxu0 0
  %265 = vmatpush1.bf16.msra.mxu0 0
  %266 = vmatprep.subr.bf16.mxu0 0
  %267 = vmatpush1.bf16.msra.mxu0 0
  %268 = vmatprep.subr.bf16.mxu0 0
  %269 = vmatpush1.bf16.msra.mxu0 0
  %270 = vmatprep.mubr.bf16.mxu0 0
  %271 = vmatmul.mubr.bf16.gmra.mrb[0].mxu0 %v174
  %v272 = vpop.f32.mrb[0].mxu0
  %v273 = vadd.f32 %v140, %v272
  %v274 = vpop.f32.mrb[0].mxu0
  %v275 = vpop.f32.mrb[0].mxu0
  %v276 = vadd.f32 %v140, %v275
  %v277 = vpop.f32.mrb[0].mxu0
  %278 = vmatprep.mubr.bf16.mxu0 0
  %279 = vmatmul.mubr.bf16.gmra.mrb[0].mxu0 %v175
  %v280 = vpop.f32.mrb[0].mxu0
  %v281 = vadd.f32 %v140, %v280
  %v282 = vpop.f32.mrb[0].mxu0
  %v283 = vpop.f32.mrb[0].mxu0
  %v284 = vadd.f32 %v140, %v283
  %v285 = vpop.f32.mrb[0].mxu0
  %286 = vmatprep.mubr.bf16.mxu0 0
  %287 = vmatmul.mubr.bf16.gmra.mrb[0].mxu0 %v176
  %v288 = vpop.f32.mrb[0].mxu0
  %v289 = vadd.f32 %v140, %v288
  %v290 = vpop.f32.mrb[0].mxu0
  %v291 = vpop.f32.mrb[0].mxu0
  %v292 = vadd.f32 %v140, %v291
  %v293 = vpop.f32.mrb[0].mxu0
  %294 = vmatprep.mubr.bf16.mxu0 0
  %295 = vmatmul.mubr.bf16.gmra.mrb[0].mxu0 %v177
  %v296 = vpop.f32.mrb[0].mxu0
  %v297 = vadd.f32 %v140, %v296
  %v298 = vpop.f32.mrb[0].mxu0
  %v299 = vpop.f32.mrb[0].mxu0
  %v300 = vadd.f32 %v140, %v299
  %v301 = vpop.f32.mrb[0].mxu0
  %302 = vmatprep.mubr.bf16.mxu0 0
  %303 = vmatmul.mubr.bf16.gmra.mrb[0].mxu0 %v178
  %v304 = vpop.f32.mrb[0].mxu0
  %v305 = vadd.f32 %v140, %v304
  %v306 = vpop.f32.mrb[0].mxu0
  %v307 = vpop.f32.mrb[0].mxu0
  %v308 = vadd.f32 %v140, %v307
  %v309 = vpop.f32.mrb[0].mxu0
  %310 = vmatprep.mubr.bf16.mxu0 0
  %311 = vmatmul.mubr.bf16.gmra.mrb[0].mxu0 %v179
  %v312 = vpop.f32.mrb[0].mxu0
  %v313 = vadd.f32 %v140, %v312
  %v314 = vpop.f32.mrb[0].mxu0
  %v315 = vpop.f32.mrb[0].mxu0
  %v316 = vadd.f32 %v140, %v315
  %v317 = vpop.f32.mrb[0].mxu0
  %318 = vmatprep.mubr.bf16.mxu0 0
  %319 = vmatmul.mubr.bf16.gmra.mrb[0].mxu0 %v180
  %v320 = vpop.f32.mrb[0].mxu0
  %v321 = vadd.f32 %v140, %v320
  %v322 = vpop.f32.mrb[0].mxu0
  %v323 = vpop.f32.mrb[0].mxu0
  %v324 = vadd.f32 %v140, %v323
  %v325 = vpop.f32.mrb[0].mxu0
  %326 = vmatprep.mubr.bf16.mxu0 0
  %327 = vmatmul.mubr.bf16.gmra.mrb[0].mxu0 %v181
  %v328 = vpop.f32.mrb[0].mxu0
  %v329 = vadd.f32 %v140, %v328
  %v330 = vpop.f32.mrb[0].mxu0
  %v331 = vpop.f32.mrb[0].mxu0
  %v332 = vadd.f32 %v140, %v331
  %v333 = vpop.f32.mrb[0].mxu0
  %334 = vdwg.mxu0
  %v335 = vld [vmem:[%s3] sm:$0x1]
  %336 = vmatprep.subr.mxu0 0.0
  %337 = vmatpush1.xpose.msra.mxu0 %v273
  %338 = vmatprep.subr.mxu0 0.0
  %339 = vmatpush1.xpose.msra.mxu0 %v276
  %340 = vmatprep.subr.mxu0 0.0
  %341 = vmatpush1.xpose.msra.mxu0 %v281
  %342 = vmatprep.subr.mxu0 0.0
  %343 = vmatpush1.xpose.msra.mxu0 %v284
  %344 = vmatprep.subr.mxu0 0.0
  %345 = vmatpush1.xpose.msra.mxu0 %v289
  %346 = vmatprep.subr.mxu0 0.0
  %347 = vmatpush1.xpose.msra.mxu0 %v292
  %348 = vmatprep.subr.mxu0 0.0
  %349 = vmatpush1.xpose.msra.mxu0 %v297
  %350 = vmatprep.subr.mxu0 0.0
  %351 = vmatpush1.xpose.msra.mxu0 %v300
  %352 = vmatprep.subr.mxu0 0.0
  %353 = vmatpush1.xpose.msra.mxu0 %v305
  %354 = vmatprep.subr.mxu0 0.0
  %355 = vmatpush1.xpose.msra.mxu0 %v308
  %356 = vmatprep.subr.mxu0 0.0
  %357 = vmatpush1.xpose.msra.mxu0 %v313
  %358 = vmatprep.subr.mxu0 0.0
  %359 = vmatpush1.xpose.msra.mxu0 %v316
  %360 = vmatprep.subr.mxu0 0.0
  %361 = vmatpush1.xpose.msra.mxu0 %v321
  %362 = vmatprep.subr.mxu0 0.0
  %363 = vmatpush1.xpose.msra.mxu0 %v324
  %364 = vmatprep.subr.mxu0 0.0
  %365 = vmatpush1.xpose.msra.mxu0 %v329
  %366 = vmatprep.subr.mxu0 0.0
  %367 = vmatpush1.xpose.msra.mxu0 %v332
  %368 = vmatprep.subr.mxu0 0.0
  %369 = vmatpush1.xpose.msra.mxu0 0.0
  %370 = vmatprep.subr.mxu0 0.0
  %371 = vmatpush1.xpose.msra.mxu0 0.0
  %372 = vmatprep.subr.mxu0 0.0
  %373 = vmatpush1.xpose.msra.mxu0 0.0
  %374 = vmatprep.subr.mxu0 0.0
  %375 = vmatpush1.xpose.msra.mxu0 0.0
  %376 = vmatprep.subr.mxu0 0.0
  %377 = vmatpush1.xpose.msra.mxu0 0.0
  %378 = vmatprep.subr.mxu0 0.0
  %379 = vmatpush1.xpose.msra.mxu0 0.0
  %380 = vmatprep.subr.mxu0 0.0
  %381 = vmatpush1.xpose.msra.mxu0 0.0
  %382 = vmatprep.subr.mxu0 0.0
  %383 = vmatpush1.xpose.msra.mxu0 0.0
  %384 = vmatprep.subr.mxu0 0.0
  %385 = vmatpush1.xpose.msra.mxu0 0.0
  %386 = vmatprep.subr.mxu0 0.0
  %387 = vmatpush1.xpose.msra.mxu0 0.0
  %388 = vmatprep.subr.mxu0 0.0
  %389 = vmatpush1.xpose.msra.mxu0 0.0
  %390 = vmatprep.subr.mxu0 0.0
  %391 = vmatpush1.xpose.msra.mxu0 0.0
  %392 = vmatprep.subr.mxu0 0.0
  %393 = vmatpush1.xpose.msra.mxu0 0.0
  %394 = vmatprep.subr.mxu0 0.0
  %395 = vmatpush1.xpose.msra.mxu0 0.0
  %396 = vmatprep.subr.mxu0 0.0
  %397 = vmatpush1.xpose.msra.mxu0 0.0
  %398 = vmatprep.subr.mxu0 0.0
  %399 = vmatpush1.xpose.msra.mxu0 0.0
  %400 = vmatprep.mubr.f32.mxu0 0.0
  %401 = vmatmul.mubr.f32.gmra.mrb[0].mxu0 %v335
  %v402 = vpop.f32.mrb[0].mxu0
  %v403 = vadd.f32 0.0, %v402
  %v404 = vpop.f32.mrb[0].mxu0
  %405 = vdwg.mxu0
  %v406 = vld [vmem:[%s4] sm:$0x1]
  %v408 = vlaneseq
  %v409 = vshrl.u32 %v408, 7
  %v410 = vsub.s32 0, %v409
  %v411 = vrot.slane %v406, %v410
  %v413 = vmul.f32 %v273, %v411
  %v414 = vmul.f32 %v276, %v411
  %v415 = vmul.f32 %v281, %v411
  %v416 = vmul.f32 %v284, %v411
  %v417 = vmul.f32 %v289, %v411
  %v418 = vmul.f32 %v292, %v411
  %v419 = vmul.f32 %v297, %v411
  %v420 = vmul.f32 %v300, %v411
  %v421 = vmul.f32 %v305, %v411
  %v422 = vmul.f32 %v308, %v411
  %v423 = vmul.f32 %v313, %v411
  %v424 = vmul.f32 %v316, %v411
  %v425 = vmul.f32 %v321, %v411
  %v426 = vmul.f32 %v324, %v411
  %v427 = vmul.f32 %v329, %v411
  %v428 = vmul.f32 %v332, %v411
  %429 = vadd.xlane.f32.xlu0 %v413
  %v430 = vpop.xlane.xlu0 %429
  %431 = vadd.xlane.f32.xlu0 %v414
  %v432 = vpop.xlane.xlu0 %431
  %433 = vadd.xlane.f32.xlu0 %v415
  %v434 = vpop.xlane.xlu0 %433
  %435 = vadd.xlane.f32.xlu0 %v416
  %v436 = vpop.xlane.xlu0 %435
  %437 = vadd.xlane.f32.xlu0 %v417
  %v438 = vpop.xlane.xlu0 %437
  %439 = vadd.xlane.f32.xlu0 %v418
  %v440 = vpop.xlane.xlu0 %439
  %441 = vadd.xlane.f32.xlu0 %v419
  %v442 = vpop.xlane.xlu0 %441
  %443 = vadd.xlane.f32.xlu0 %v420
  %v444 = vpop.xlane.xlu0 %443
  %445 = vadd.xlane.f32.xlu0 %v421
  %v446 = vpop.xlane.xlu0 %445
  %447 = vadd.xlane.f32.xlu0 %v422
  %v448 = vpop.xlane.xlu0 %447
  %449 = vadd.xlane.f32.xlu0 %v423
  %v450 = vpop.xlane.xlu0 %449
  %451 = vadd.xlane.f32.xlu0 %v424
  %v452 = vpop.xlane.xlu0 %451
  %453 = vadd.xlane.f32.xlu0 %v425
  %v454 = vpop.xlane.xlu0 %453
  %455 = vadd.xlane.f32.xlu0 %v426
  %v456 = vpop.xlane.xlu0 %455
  %457 = vadd.xlane.f32.xlu0 %v427
  %v458 = vpop.xlane.xlu0 %457
  %459 = vadd.xlane.f32.xlu0 %v428
  %v460 = vpop.xlane.xlu0 %459
  %v461 = vlaneseq
  %v462 = vshrl.u32 %v461, 7
  %v463 = vsub.s32 0, %v462
  %v464 = vrot.slane %v403, %v463
  %v465 = vadd.f32 %v430, %v464
  %v466 = vadd.f32 %v432, %v464
  %v467 = vadd.f32 %v434, %v464
  %v468 = vadd.f32 %v436, %v464
  %v469 = vadd.f32 %v438, %v464
  %v470 = vadd.f32 %v440, %v464
  %v471 = vadd.f32 %v442, %v464
  %v472 = vadd.f32 %v444, %v464
  %v473 = vadd.f32 %v446, %v464
  %v474 = vadd.f32 %v448, %v464
  %v475 = vadd.f32 %v450, %v464
  %v476 = vadd.f32 %v452, %v464
  %v477 = vadd.f32 %v454, %v464
  %v478 = vadd.f32 %v456, %v464
  %v479 = vadd.f32 %v458, %v464
  %v480 = vadd.f32 %v460, %v464
  %vm481 = vcmp.gt.f32.partialorder %v465, 0.0
  %vm482 = vcmp.gt.f32.partialorder %v466, 0.0
  %vm483 = vcmp.gt.f32.partialorder %v467, 0.0
  %vm484 = vcmp.gt.f32.partialorder %v468, 0.0
  %vm485 = vcmp.gt.f32.partialorder %v469, 0.0
  %vm486 = vcmp.gt.f32.partialorder %v470, 0.0
  %vm487 = vcmp.gt.f32.partialorder %v471, 0.0
  %vm488 = vcmp.gt.f32.partialorder %v472, 0.0
  %vm489 = vcmp.gt.f32.partialorder %v473, 0.0
  %vm490 = vcmp.gt.f32.partialorder %v474, 0.0
  %vm491 = vcmp.gt.f32.partialorder %v475, 0.0
  %vm492 = vcmp.gt.f32.partialorder %v476, 0.0
  %vm493 = vcmp.gt.f32.partialorder %v477, 0.0
  %vm494 = vcmp.gt.f32.partialorder %v478, 0.0
  %vm495 = vcmp.gt.f32.partialorder %v479, 0.0
  %vm496 = vcmp.gt.f32.partialorder %v480, 0.0
  %v497 = vmul.f32 %v465, 0.2
  %v498 = vmul.f32 %v466, 0.2
  %v499 = vmul.f32 %v467, 0.2
  %v500 = vmul.f32 %v468, 0.2
  %v501 = vmul.f32 %v469, 0.2
  %v502 = vmul.f32 %v470, 0.2
  %v503 = vmul.f32 %v471, 0.2
  %v504 = vmul.f32 %v472, 0.2
  %v505 = vmul.f32 %v473, 0.2
  %v506 = vmul.f32 %v474, 0.2
  %v507 = vmul.f32 %v475, 0.2
  %v508 = vmul.f32 %v476, 0.2
  %v509 = vmul.f32 %v477, 0.2
  %v510 = vmul.f32 %v478, 0.2
  %v511 = vmul.f32 %v479, 0.2
  %v512 = vmul.f32 %v480, 0.2
  %v513 = vsel %vm481, %v465, %v497
  %v514 = vsel %vm482, %v466, %v498
  %v515 = vsel %vm483, %v467, %v499
  %v516 = vsel %vm484, %v468, %v500
  %v517 = vsel %vm485, %v469, %v501
  %v518 = vsel %vm486, %v470, %v502
  %v519 = vsel %vm487, %v471, %v503
  %v520 = vsel %vm488, %v472, %v504
  %v521 = vsel %vm489, %v473, %v505
  %v522 = vsel %vm490, %v474, %v506
  %v523 = vsel %vm491, %v475, %v507
  %v524 = vsel %vm492, %v476, %v508
  %v525 = vsel %vm493, %v477, %v509
  %v526 = vsel %vm494, %v478, %v510
  %v527 = vsel %vm495, %v479, %v511
  %v528 = vsel %vm496, %v480, %v512
  %v529 = vsel %vm87, %v513, -1e+30
  %v530 = vsel %vm88, %v514, -1e+30
  %v531 = vsel %vm89, %v515, -1e+30
  %v532 = vsel %vm90, %v516, -1e+30
  %v533 = vsel %vm91, %v517, -1e+30
  %v534 = vsel %vm92, %v518, -1e+30
  %v535 = vsel %vm93, %v519, -1e+30
  %v536 = vsel %vm94, %v520, -1e+30
  %v537 = vsel %vm95, %v521, -1e+30
  %v538 = vsel %vm96, %v522, -1e+30
  %v539 = vsel %vm97, %v523, -1e+30
  %v540 = vsel %vm98, %v524, -1e+30
  %v541 = vsel %vm99, %v525, -1e+30
  %v542 = vsel %vm100, %v526, -1e+30
  %v543 = vsel %vm101, %v527, -1e+30
  %v544 = vsel %vm102, %v528, -1e+30
  %545 = vmax.xlane.f32.xlu0 %v529
  %v546 = vpop.xlane.xlu0 %545
  %547 = vmax.xlane.f32.xlu0 %v530
  %v548 = vpop.xlane.xlu0 %547
  %549 = vmax.xlane.f32.xlu0 %v531
  %v550 = vpop.xlane.xlu0 %549
  %551 = vmax.xlane.f32.xlu0 %v532
  %v552 = vpop.xlane.xlu0 %551
  %553 = vmax.xlane.f32.xlu0 %v533
  %v554 = vpop.xlane.xlu0 %553
  %555 = vmax.xlane.f32.xlu0 %v534
  %v556 = vpop.xlane.xlu0 %555
  %557 = vmax.xlane.f32.xlu0 %v535
  %v558 = vpop.xlane.xlu0 %557
  %559 = vmax.xlane.f32.xlu0 %v536
  %v560 = vpop.xlane.xlu0 %559
  %561 = vmax.xlane.f32.xlu0 %v537
  %v562 = vpop.xlane.xlu0 %561
  %563 = vmax.xlane.f32.xlu0 %v538
  %v564 = vpop.xlane.xlu0 %563
  %565 = vmax.xlane.f32.xlu0 %v539
  %v566 = vpop.xlane.xlu0 %565
  %567 = vmax.xlane.f32.xlu0 %v540
  %v568 = vpop.xlane.xlu0 %567
  %569 = vmax.xlane.f32.xlu0 %v541
  %v570 = vpop.xlane.xlu0 %569
  %571 = vmax.xlane.f32.xlu0 %v542
  %v572 = vpop.xlane.xlu0 %571
  %573 = vmax.xlane.f32.xlu0 %v543
  %v574 = vpop.xlane.xlu0 %573
  %575 = vmax.xlane.f32.xlu0 %v544
  %v576 = vpop.xlane.xlu0 %575
  %v577 = vsub.f32 %v529, %v546
  %v578 = vsub.f32 %v530, %v548
  %v579 = vsub.f32 %v531, %v550
  %v580 = vsub.f32 %v532, %v552
  %v581 = vsub.f32 %v533, %v554
  %v582 = vsub.f32 %v534, %v556
  %v583 = vsub.f32 %v535, %v558
  %v584 = vsub.f32 %v536, %v560
  %v585 = vsub.f32 %v537, %v562
  %v586 = vsub.f32 %v538, %v564
  %v587 = vsub.f32 %v539, %v566
  %v588 = vsub.f32 %v540, %v568
  %v589 = vsub.f32 %v541, %v570
  %v590 = vsub.f32 %v542, %v572
  %v591 = vsub.f32 %v543, %v574
  %v592 = vsub.f32 %v544, %v576
  %v593 = vmul.f32 %v577, 1.442695
  %v594 = vpow.pop %v593
  %v595 = vmul.f32 %v578, 1.442695
  %v596 = vpow.pop %v595
  %v597 = vmul.f32 %v579, 1.442695
  %v598 = vpow.pop %v597
  %v599 = vmul.f32 %v580, 1.442695
  %v600 = vpow.pop %v599
  %v601 = vmul.f32 %v581, 1.442695
  %v602 = vpow.pop %v601
  %v603 = vmul.f32 %v582, 1.442695
  %v604 = vpow.pop %v603
  %v605 = vmul.f32 %v583, 1.442695
  %v606 = vpow.pop %v605
  %v607 = vmul.f32 %v584, 1.442695
  %v608 = vpow.pop %v607
  %v609 = vmul.f32 %v585, 1.442695
  %v610 = vpow.pop %v609
  %v611 = vmul.f32 %v586, 1.442695
  %v612 = vpow.pop %v611
  %v613 = vmul.f32 %v587, 1.442695
  %v614 = vpow.pop %v613
  %v615 = vmul.f32 %v588, 1.442695
  %v616 = vpow.pop %v615
  %v617 = vmul.f32 %v589, 1.442695
  %v618 = vpow.pop %v617
  %v619 = vmul.f32 %v590, 1.442695
  %v620 = vpow.pop %v619
  %v621 = vmul.f32 %v591, 1.442695
  %v622 = vpow.pop %v621
  %v623 = vmul.f32 %v592, 1.442695
  %v624 = vpow.pop %v623
  %v625 = vsel %vm87, %v594, 0.0
  %v626 = vsel %vm88, %v596, 0.0
  %v627 = vsel %vm89, %v598, 0.0
  %v628 = vsel %vm90, %v600, 0.0
  %v629 = vsel %vm91, %v602, 0.0
  %v630 = vsel %vm92, %v604, 0.0
  %v631 = vsel %vm93, %v606, 0.0
  %v632 = vsel %vm94, %v608, 0.0
  %v633 = vsel %vm95, %v610, 0.0
  %v634 = vsel %vm96, %v612, 0.0
  %v635 = vsel %vm97, %v614, 0.0
  %v636 = vsel %vm98, %v616, 0.0
  %v637 = vsel %vm99, %v618, 0.0
  %v638 = vsel %vm100, %v620, 0.0
  %v639 = vsel %vm101, %v622, 0.0
  %v640 = vsel %vm102, %v624, 0.0
  %641 = vadd.xlane.f32.xlu0 %v625
  %v642 = vpop.xlane.xlu0 %641
  %643 = vadd.xlane.f32.xlu0 %v626
  %v644 = vpop.xlane.xlu0 %643
  %645 = vadd.xlane.f32.xlu0 %v627
  %v646 = vpop.xlane.xlu0 %645
  %647 = vadd.xlane.f32.xlu0 %v628
  %v648 = vpop.xlane.xlu0 %647
  %649 = vadd.xlane.f32.xlu0 %v629
  %v650 = vpop.xlane.xlu0 %649
  %651 = vadd.xlane.f32.xlu0 %v630
  %v652 = vpop.xlane.xlu0 %651
  %653 = vadd.xlane.f32.xlu0 %v631
  %v654 = vpop.xlane.xlu0 %653
  %655 = vadd.xlane.f32.xlu0 %v632
  %v656 = vpop.xlane.xlu0 %655
  %657 = vadd.xlane.f32.xlu0 %v633
  %v658 = vpop.xlane.xlu0 %657
  %659 = vadd.xlane.f32.xlu0 %v634
  %v660 = vpop.xlane.xlu0 %659
  %661 = vadd.xlane.f32.xlu0 %v635
  %v662 = vpop.xlane.xlu0 %661
  %663 = vadd.xlane.f32.xlu0 %v636
  %v664 = vpop.xlane.xlu0 %663
  %665 = vadd.xlane.f32.xlu0 %v637
  %v666 = vpop.xlane.xlu0 %665
  %667 = vadd.xlane.f32.xlu0 %v638
  %v668 = vpop.xlane.xlu0 %667
  %669 = vadd.xlane.f32.xlu0 %v639
  %v670 = vpop.xlane.xlu0 %669
  %671 = vadd.xlane.f32.xlu0 %v640
  %v672 = vpop.xlane.xlu0 %671
  %vm673 = vcmp.gt.f32.partialorder %v642, 0.0
  %vm674 = vcmp.gt.f32.partialorder %v644, 0.0
  %vm675 = vcmp.gt.f32.partialorder %v646, 0.0
  %vm676 = vcmp.gt.f32.partialorder %v648, 0.0
  %vm677 = vcmp.gt.f32.partialorder %v650, 0.0
  %vm678 = vcmp.gt.f32.partialorder %v652, 0.0
  %vm679 = vcmp.gt.f32.partialorder %v654, 0.0
  %vm680 = vcmp.gt.f32.partialorder %v656, 0.0
  %vm681 = vcmp.gt.f32.partialorder %v658, 0.0
  %vm682 = vcmp.gt.f32.partialorder %v660, 0.0
  %vm683 = vcmp.gt.f32.partialorder %v662, 0.0
  %vm684 = vcmp.gt.f32.partialorder %v664, 0.0
  %vm685 = vcmp.gt.f32.partialorder %v666, 0.0
  %vm686 = vcmp.gt.f32.partialorder %v668, 0.0
  %vm687 = vcmp.gt.f32.partialorder %v670, 0.0
  %vm688 = vcmp.gt.f32.partialorder %v672, 0.0
  %v689 = vsel %vm673, %v642, 1.0
  %v690 = vsel %vm674, %v644, 1.0
  %v691 = vsel %vm675, %v646, 1.0
  %v692 = vsel %vm676, %v648, 1.0
  %v693 = vsel %vm677, %v650, 1.0
  %v694 = vsel %vm678, %v652, 1.0
  %v695 = vsel %vm679, %v654, 1.0
  %v696 = vsel %vm680, %v656, 1.0
  %v697 = vsel %vm681, %v658, 1.0
  %v698 = vsel %vm682, %v660, 1.0
  %v699 = vsel %vm683, %v662, 1.0
  %v700 = vsel %vm684, %v664, 1.0
  %v701 = vsel %vm685, %v666, 1.0
  %v702 = vsel %vm686, %v668, 1.0
  %v703 = vsel %vm687, %v670, 1.0
  %v704 = vsel %vm688, %v672, 1.0
  %v705 = vrcp.pop %v689
  %v706 = vrcp.pop %v690
  %v707 = vrcp.pop %v691
  %v708 = vrcp.pop %v692
  %v709 = vrcp.pop %v693
  %v710 = vrcp.pop %v694
  %v711 = vrcp.pop %v695
  %v712 = vrcp.pop %v696
  %v713 = vrcp.pop %v697
  %v714 = vrcp.pop %v698
  %v715 = vrcp.pop %v699
  %v716 = vrcp.pop %v700
  %v717 = vrcp.pop %v701
  %v718 = vrcp.pop %v702
  %v719 = vrcp.pop %v703
  %v720 = vrcp.pop %v704
  %v721 = vmul.f32 %v625, %v705
  %v722 = vmul.f32 %v626, %v706
  %v723 = vmul.f32 %v627, %v707
  %v724 = vmul.f32 %v628, %v708
  %v725 = vmul.f32 %v629, %v709
  %v726 = vmul.f32 %v630, %v710
  %v727 = vmul.f32 %v631, %v711
  %v728 = vmul.f32 %v632, %v712
  %v729 = vmul.f32 %v633, %v713
  %v730 = vmul.f32 %v634, %v714
  %v731 = vmul.f32 %v635, %v715
  %v732 = vmul.f32 %v636, %v716
  %v733 = vmul.f32 %v637, %v717
  %v734 = vmul.f32 %v638, %v718
  %v735 = vmul.f32 %v639, %v719
  %v736 = vmul.f32 %v640, %v720
  %v737 = vpack.c.bf16 %v722, %v721
  %v738 = vpack.c.bf16 %v724, %v723
  %v739 = vpack.c.bf16 %v726, %v725
  %v740 = vpack.c.bf16 %v728, %v727
  %v741 = vpack.c.bf16 %v730, %v729
  %v742 = vpack.c.bf16 %v732, %v731
  %v743 = vpack.c.bf16 %v734, %v733
  %v744 = vpack.c.bf16 %v736, %v735
  %v745 = vpack.c.bf16 %v276, %v273
  %v746 = vpack.c.bf16 %v284, %v281
  %v747 = vpack.c.bf16 %v292, %v289
  %v748 = vpack.c.bf16 %v300, %v297
  %v749 = vpack.c.bf16 %v308, %v305
  %v750 = vpack.c.bf16 %v316, %v313
  %v751 = vpack.c.bf16 %v324, %v321
  %v752 = vpack.c.bf16 %v332, %v329
  %753 = vmatprep.subr.bf16.mxu0 0
  %754 = vmatpush1.bf16.msra.mxu0 %v745
  %755 = vmatprep.subr.bf16.mxu0 0
  %756 = vmatpush1.bf16.msra.mxu0 %v746
  %757 = vmatprep.subr.bf16.mxu0 0
  %758 = vmatpush1.bf16.msra.mxu0 %v747
  %759 = vmatprep.subr.bf16.mxu0 0
  %760 = vmatpush1.bf16.msra.mxu0 %v748
  %761 = vmatprep.subr.bf16.mxu0 0
  %762 = vmatpush1.bf16.msra.mxu0 %v749
  %763 = vmatprep.subr.bf16.mxu0 0
  %764 = vmatpush1.bf16.msra.mxu0 %v750
  %765 = vmatprep.subr.bf16.mxu0 0
  %766 = vmatpush1.bf16.msra.mxu0 %v751
  %767 = vmatprep.subr.bf16.mxu0 0
  %768 = vmatpush1.bf16.msra.mxu0 %v752
  %769 = vmatprep.subr.bf16.mxu0 0
  %770 = vmatpush1.bf16.msra.mxu0 0
  %771 = vmatprep.subr.bf16.mxu0 0
  %772 = vmatpush1.bf16.msra.mxu0 0
  %773 = vmatprep.subr.bf16.mxu0 0
  %774 = vmatpush1.bf16.msra.mxu0 0
  %775 = vmatprep.subr.bf16.mxu0 0
  %776 = vmatpush1.bf16.msra.mxu0 0
  %777 = vmatprep.subr.bf16.mxu0 0
  %778 = vmatpush1.bf16.msra.mxu0 0
  %779 = vmatprep.subr.bf16.mxu0 0
  %780 = vmatpush1.bf16.msra.mxu0 0
  %781 = vmatprep.subr.bf16.mxu0 0
  %782 = vmatpush1.bf16.msra.mxu0 0
  %783 = vmatprep.subr.bf16.mxu0 0
  %784 = vmatpush1.bf16.msra.mxu0 0
  %785 = vmatprep.mubr.bf16.mxu0 0
  %786 = vmatmul.mubr.bf16.gmra.mrb[0].mxu0 %v737
  %v787 = vpop.f32.mrb[0].mxu0
  %v788 = vadd.f32 0.0, %v787
  %v789 = vpop.f32.mrb[0].mxu0
  %v790 = vpop.f32.mrb[0].mxu0
  %v791 = vadd.f32 0.0, %v790
  %v792 = vpop.f32.mrb[0].mxu0
  %793 = vmatprep.mubr.bf16.mxu0 0
  %794 = vmatmul.mubr.bf16.gmra.mrb[0].mxu0 %v738
  %v795 = vpop.f32.mrb[0].mxu0
  %v796 = vadd.f32 0.0, %v795
  %v797 = vpop.f32.mrb[0].mxu0
  %v798 = vpop.f32.mrb[0].mxu0
  %v799 = vadd.f32 0.0, %v798
  %v800 = vpop.f32.mrb[0].mxu0
  %801 = vmatprep.mubr.bf16.mxu0 0
  %802 = vmatmul.mubr.bf16.gmra.mrb[0].mxu0 %v739
  %v803 = vpop.f32.mrb[0].mxu0
  %v804 = vadd.f32 0.0, %v803
  %v805 = vpop.f32.mrb[0].mxu0
  %v806 = vpop.f32.mrb[0].mxu0
  %v807 = vadd.f32 0.0, %v806
  %v808 = vpop.f32.mrb[0].mxu0
  %809 = vmatprep.mubr.bf16.mxu0 0
  %810 = vmatmul.mubr.bf16.gmra.mrb[0].mxu0 %v740
  %v811 = vpop.f32.mrb[0].mxu0
  %v812 = vadd.f32 0.0, %v811
  %v813 = vpop.f32.mrb[0].mxu0
  %v814 = vpop.f32.mrb[0].mxu0
  %v815 = vadd.f32 0.0, %v814
  %v816 = vpop.f32.mrb[0].mxu0
  %817 = vmatprep.mubr.bf16.mxu0 0
  %818 = vmatmul.mubr.bf16.gmra.mrb[0].mxu0 %v741
  %v819 = vpop.f32.mrb[0].mxu0
  %v820 = vadd.f32 0.0, %v819
  %v821 = vpop.f32.mrb[0].mxu0
  %v822 = vpop.f32.mrb[0].mxu0
  %v823 = vadd.f32 0.0, %v822
  %v824 = vpop.f32.mrb[0].mxu0
  %825 = vmatprep.mubr.bf16.mxu0 0
  %826 = vmatmul.mubr.bf16.gmra.mrb[0].mxu0 %v742
  %v827 = vpop.f32.mrb[0].mxu0
  %v828 = vadd.f32 0.0, %v827
  %v829 = vpop.f32.mrb[0].mxu0
  %v830 = vpop.f32.mrb[0].mxu0
  %v831 = vadd.f32 0.0, %v830
  %v832 = vpop.f32.mrb[0].mxu0
  %833 = vmatprep.mubr.bf16.mxu0 0
  %834 = vmatmul.mubr.bf16.gmra.mrb[0].mxu0 %v743
  %v835 = vpop.f32.mrb[0].mxu0
  %v836 = vadd.f32 0.0, %v835
  %v837 = vpop.f32.mrb[0].mxu0
  %v838 = vpop.f32.mrb[0].mxu0
  %v839 = vadd.f32 0.0, %v838
  %v840 = vpop.f32.mrb[0].mxu0
  %841 = vmatprep.mubr.bf16.mxu0 0
  %842 = vmatmul.mubr.bf16.gmra.mrb[0].mxu0 %v744
  %v843 = vpop.f32.mrb[0].mxu0
  %v844 = vadd.f32 0.0, %v843
  %v845 = vpop.f32.mrb[0].mxu0
  %v846 = vpop.f32.mrb[0].mxu0
  %v847 = vadd.f32 0.0, %v846
  %v848 = vpop.f32.mrb[0].mxu0
  %849 = vdwg.mxu0
  %v850 = vmax.f32 %v788, 0.0
  %v851 = vmax.f32 %v791, 0.0
  %v852 = vmax.f32 %v796, 0.0
  %v853 = vmax.f32 %v799, 0.0
  %v854 = vmax.f32 %v804, 0.0
  %v855 = vmax.f32 %v807, 0.0
  %v856 = vmax.f32 %v812, 0.0
  %v857 = vmax.f32 %v815, 0.0
  %v858 = vmax.f32 %v820, 0.0
  %v859 = vmax.f32 %v823, 0.0
  %v860 = vmax.f32 %v828, 0.0
  %v861 = vmax.f32 %v831, 0.0
  %v862 = vmax.f32 %v836, 0.0
  %v863 = vmax.f32 %v839, 0.0
  %v864 = vmax.f32 %v844, 0.0
  %v865 = vmax.f32 %v847, 0.0
  %v866 = vpack.c.bf16 %v851, %v850
  %v867 = vpack.c.bf16 %v853, %v852
  %v868 = vpack.c.bf16 %v855, %v854
  %v869 = vpack.c.bf16 %v857, %v856
  %v870 = vpack.c.bf16 %v859, %v858
  %v871 = vpack.c.bf16 %v861, %v860
  %v872 = vpack.c.bf16 %v863, %v862
  %v873 = vpack.c.bf16 %v865, %v864
  %v874 = vld [vmem:[%s5] sm:$0xf]
  %v875 = vld [vmem:[%s5 + $0x4] sm:$0xf]
  %v876 = vld [vmem:[%s5 + $0x8] sm:$0xf]
  %v877 = vld [vmem:[%s5 + $0xc] sm:$0xf]
  %v878 = vld [vmem:[%s5 + $0x10] sm:$0xf]
  %v879 = vld [vmem:[%s5 + $0x14] sm:$0xf]
  %v880 = vld [vmem:[%s5 + $0x18] sm:$0xf]
  %v881 = vld [vmem:[%s5 + $0x1c] sm:$0xf]
  %v882 = vld [vmem:[%s5 + $0x20] sm:$0xf]
  %v883 = vld [vmem:[%s5 + $0x24] sm:$0xf]
  %v884 = vld [vmem:[%s5 + $0x28] sm:$0xf]
  %v885 = vld [vmem:[%s5 + $0x2c] sm:$0xf]
  %v886 = vld [vmem:[%s5 + $0x30] sm:$0xf]
  %v887 = vld [vmem:[%s5 + $0x34] sm:$0xf]
  %v888 = vld [vmem:[%s5 + $0x38] sm:$0xf]
  %v889 = vld [vmem:[%s5 + $0x3c] sm:$0xf]
  %v890 = vld [vmem:[%s6] sm:$0x1]
  %v892 = vlaneseq
  %v893 = vshrl.u32 %v892, 7
  %v894 = vsub.s32 0, %v893
  %v895 = vrot.slane %v890, %v894
  %v913 = vunpack.c.l.b16 %v874
  %v914 = vunpack.c.l.b16 %v875
  %v915 = vunpack.c.l.b16 %v876
  %v916 = vunpack.c.l.b16 %v877
  %v917 = vunpack.c.l.b16 %v878
  %v918 = vunpack.c.l.b16 %v879
  %v919 = vunpack.c.l.b16 %v880
  %v920 = vunpack.c.l.b16 %v881
  %v921 = vunpack.c.l.b16 %v882
  %v922 = vunpack.c.l.b16 %v883
  %v923 = vunpack.c.l.b16 %v884
  %v924 = vunpack.c.l.b16 %v885
  %v925 = vunpack.c.l.b16 %v886
  %v926 = vunpack.c.l.b16 %v887
  %v927 = vunpack.c.l.b16 %v888
  %v928 = vunpack.c.l.b16 %v889
  %v929 = vpack.c.b16 %v914, %v913
  %v930 = vpack.c.b16 %v916, %v915
  %v931 = vpack.c.b16 %v918, %v917
  %v932 = vpack.c.b16 %v920, %v919
  %v933 = vpack.c.b16 %v922, %v921
  %v934 = vpack.c.b16 %v924, %v923
  %v935 = vpack.c.b16 %v926, %v925
  %v936 = vpack.c.b16 %v928, %v927
  %945 = vmatprep.subr.bf16.mxu0 0
  %946 = vmatpush1.bf16.msra.mxu0 %v929
  %947 = vmatprep.subr.bf16.mxu0 0
  %948 = vmatpush1.bf16.msra.mxu0 %v930
  %949 = vmatprep.subr.bf16.mxu0 0
  %950 = vmatpush1.bf16.msra.mxu0 %v931
  %951 = vmatprep.subr.bf16.mxu0 0
  %952 = vmatpush1.bf16.msra.mxu0 %v932
  %953 = vmatprep.subr.bf16.mxu0 0
  %954 = vmatpush1.bf16.msra.mxu0 %v933
  %955 = vmatprep.subr.bf16.mxu0 0
  %956 = vmatpush1.bf16.msra.mxu0 %v934
  %957 = vmatprep.subr.bf16.mxu0 0
  %958 = vmatpush1.bf16.msra.mxu0 %v935
  %959 = vmatprep.subr.bf16.mxu0 0
  %960 = vmatpush1.bf16.msra.mxu0 %v936
  %961 = vmatprep.subr.bf16.mxu0 0
  %962 = vmatpush1.bf16.msra.mxu0 0
  %963 = vmatprep.subr.bf16.mxu0 0
  %964 = vmatpush1.bf16.msra.mxu0 0
  %965 = vmatprep.subr.bf16.mxu0 0
  %966 = vmatpush1.bf16.msra.mxu0 0
  %967 = vmatprep.subr.bf16.mxu0 0
  %968 = vmatpush1.bf16.msra.mxu0 0
  %969 = vmatprep.subr.bf16.mxu0 0
  %970 = vmatpush1.bf16.msra.mxu0 0
  %971 = vmatprep.subr.bf16.mxu0 0
  %972 = vmatpush1.bf16.msra.mxu0 0
  %973 = vmatprep.subr.bf16.mxu0 0
  %974 = vmatpush1.bf16.msra.mxu0 0
  %975 = vmatprep.subr.bf16.mxu0 0
  %976 = vmatpush1.bf16.msra.mxu0 0
  %977 = vmatprep.mubr.bf16.mxu0 0
  %978 = vmatmul.mubr.bf16.gmra.mrb[0].mxu0 %v866
  %v979 = vpop.f32.mrb[0].mxu0
  %v980 = vadd.f32 %v895, %v979
  %v981 = vpop.f32.mrb[0].mxu0
  %v982 = vpop.f32.mrb[0].mxu0
  %v983 = vadd.f32 %v895, %v982
  %v984 = vpop.f32.mrb[0].mxu0
  %985 = vmatprep.mubr.bf16.mxu0 0
  %986 = vmatmul.mubr.bf16.gmra.mrb[0].mxu0 %v867
  %v987 = vpop.f32.mrb[0].mxu0
  %v988 = vadd.f32 %v895, %v987
  %v989 = vpop.f32.mrb[0].mxu0
  %v990 = vpop.f32.mrb[0].mxu0
  %v991 = vadd.f32 %v895, %v990
  %v992 = vpop.f32.mrb[0].mxu0
  %993 = vmatprep.mubr.bf16.mxu0 0
  %994 = vmatmul.mubr.bf16.gmra.mrb[0].mxu0 %v868
  %v995 = vpop.f32.mrb[0].mxu0
  %v996 = vadd.f32 %v895, %v995
  %v997 = vpop.f32.mrb[0].mxu0
  %v998 = vpop.f32.mrb[0].mxu0
  %v999 = vadd.f32 %v895, %v998
  %v1000 = vpop.f32.mrb[0].mxu0
  %1001 = vmatprep.mubr.bf16.mxu0 0
  %1002 = vmatmul.mubr.bf16.gmra.mrb[0].mxu0 %v869
  %v1003 = vpop.f32.mrb[0].mxu0
  %v1004 = vadd.f32 %v895, %v1003
  %v1005 = vpop.f32.mrb[0].mxu0
  %v1006 = vpop.f32.mrb[0].mxu0
  %v1007 = vadd.f32 %v895, %v1006
  %v1008 = vpop.f32.mrb[0].mxu0
  %1009 = vmatprep.mubr.bf16.mxu0 0
  %1010 = vmatmul.mubr.bf16.gmra.mrb[0].mxu0 %v870
  %v1011 = vpop.f32.mrb[0].mxu0
  %v1012 = vadd.f32 %v895, %v1011
  %v1013 = vpop.f32.mrb[0].mxu0
  %v1014 = vpop.f32.mrb[0].mxu0
  %v1015 = vadd.f32 %v895, %v1014
  %v1016 = vpop.f32.mrb[0].mxu0
  %1017 = vmatprep.mubr.bf16.mxu0 0
  %1018 = vmatmul.mubr.bf16.gmra.mrb[0].mxu0 %v871
  %v1019 = vpop.f32.mrb[0].mxu0
  %v1020 = vadd.f32 %v895, %v1019
  %v1021 = vpop.f32.mrb[0].mxu0
  %v1022 = vpop.f32.mrb[0].mxu0
  %v1023 = vadd.f32 %v895, %v1022
  %v1024 = vpop.f32.mrb[0].mxu0
  %1025 = vmatprep.mubr.bf16.mxu0 0
  %1026 = vmatmul.mubr.bf16.gmra.mrb[0].mxu0 %v872
  %v1027 = vpop.f32.mrb[0].mxu0
  %v1028 = vadd.f32 %v895, %v1027
  %v1029 = vpop.f32.mrb[0].mxu0
  %v1030 = vpop.f32.mrb[0].mxu0
  %v1031 = vadd.f32 %v895, %v1030
  %v1032 = vpop.f32.mrb[0].mxu0
  %1033 = vmatprep.mubr.bf16.mxu0 0
  %1034 = vmatmul.mubr.bf16.gmra.mrb[0].mxu0 %v873
  %v1035 = vpop.f32.mrb[0].mxu0
  %v1036 = vadd.f32 %v895, %v1035
  %v1037 = vpop.f32.mrb[0].mxu0
  %v1038 = vpop.f32.mrb[0].mxu0
  %v1039 = vadd.f32 %v895, %v1038
  %v1040 = vpop.f32.mrb[0].mxu0
  %1041 = vdwg.mxu0
  %v1042 = vld [vmem:[%s7] sm:$0x1]
  %1043 = vmatprep.subr.mxu0 0.0
  %1044 = vmatpush1.xpose.msra.mxu0 %v980
  %1045 = vmatprep.subr.mxu0 0.0
  %1046 = vmatpush1.xpose.msra.mxu0 %v983
  %1047 = vmatprep.subr.mxu0 0.0
  %1048 = vmatpush1.xpose.msra.mxu0 %v988
  %1049 = vmatprep.subr.mxu0 0.0
  %1050 = vmatpush1.xpose.msra.mxu0 %v991
  %1051 = vmatprep.subr.mxu0 0.0
  %1052 = vmatpush1.xpose.msra.mxu0 %v996
  %1053 = vmatprep.subr.mxu0 0.0
  %1054 = vmatpush1.xpose.msra.mxu0 %v999
  %1055 = vmatprep.subr.mxu0 0.0
  %1056 = vmatpush1.xpose.msra.mxu0 %v1004
  %1057 = vmatprep.subr.mxu0 0.0
  %1058 = vmatpush1.xpose.msra.mxu0 %v1007
  %1059 = vmatprep.subr.mxu0 0.0
  %1060 = vmatpush1.xpose.msra.mxu0 %v1012
  %1061 = vmatprep.subr.mxu0 0.0
  %1062 = vmatpush1.xpose.msra.mxu0 %v1015
  %1063 = vmatprep.subr.mxu0 0.0
  %1064 = vmatpush1.xpose.msra.mxu0 %v1020
  %1065 = vmatprep.subr.mxu0 0.0
  %1066 = vmatpush1.xpose.msra.mxu0 %v1023
  %1067 = vmatprep.subr.mxu0 0.0
  %1068 = vmatpush1.xpose.msra.mxu0 %v1028
  %1069 = vmatprep.subr.mxu0 0.0
  %1070 = vmatpush1.xpose.msra.mxu0 %v1031
  %1071 = vmatprep.subr.mxu0 0.0
  %1072 = vmatpush1.xpose.msra.mxu0 %v1036
  %1073 = vmatprep.subr.mxu0 0.0
  %1074 = vmatpush1.xpose.msra.mxu0 %v1039
  %1075 = vmatprep.subr.mxu0 0.0
  %1076 = vmatpush1.xpose.msra.mxu0 0.0
  %1077 = vmatprep.subr.mxu0 0.0
  %1078 = vmatpush1.xpose.msra.mxu0 0.0
  %1079 = vmatprep.subr.mxu0 0.0
  %1080 = vmatpush1.xpose.msra.mxu0 0.0
  %1081 = vmatprep.subr.mxu0 0.0
  %1082 = vmatpush1.xpose.msra.mxu0 0.0
  %1083 = vmatprep.subr.mxu0 0.0
  %1084 = vmatpush1.xpose.msra.mxu0 0.0
  %1085 = vmatprep.subr.mxu0 0.0
  %1086 = vmatpush1.xpose.msra.mxu0 0.0
  %1087 = vmatprep.subr.mxu0 0.0
  %1088 = vmatpush1.xpose.msra.mxu0 0.0
  %1089 = vmatprep.subr.mxu0 0.0
  %1090 = vmatpush1.xpose.msra.mxu0 0.0
  %1091 = vmatprep.subr.mxu0 0.0
  %1092 = vmatpush1.xpose.msra.mxu0 0.0
  %1093 = vmatprep.subr.mxu0 0.0
  %1094 = vmatpush1.xpose.msra.mxu0 0.0
  %1095 = vmatprep.subr.mxu0 0.0
  %1096 = vmatpush1.xpose.msra.mxu0 0.0
  %1097 = vmatprep.subr.mxu0 0.0
  %1098 = vmatpush1.xpose.msra.mxu0 0.0
  %1099 = vmatprep.subr.mxu0 0.0
  %1100 = vmatpush1.xpose.msra.mxu0 0.0
  %1101 = vmatprep.subr.mxu0 0.0
  %1102 = vmatpush1.xpose.msra.mxu0 0.0
  %1103 = vmatprep.subr.mxu0 0.0
  %1104 = vmatpush1.xpose.msra.mxu0 0.0
  %1105 = vmatprep.subr.mxu0 0.0
  %1106 = vmatpush1.xpose.msra.mxu0 0.0
  %1107 = vmatprep.mubr.f32.mxu0 0.0
  %1108 = vmatmul.mubr.f32.gmra.mrb[0].mxu0 %v1042
  %v1109 = vpop.f32.mrb[0].mxu0
  %v1110 = vadd.f32 0.0, %v1109
  %v1111 = vpop.f32.mrb[0].mxu0
  %1112 = vdwg.mxu0
  %v1113 = vld [vmem:[%s8] sm:$0x1]
  %v1115 = vlaneseq
  %v1116 = vshrl.u32 %v1115, 7
  %v1117 = vsub.s32 0, %v1116
  %v1118 = vrot.slane %v1113, %v1117
  %v1120 = vmul.f32 %v980, %v1118
  %v1121 = vmul.f32 %v983, %v1118
  %v1122 = vmul.f32 %v988, %v1118
  %v1123 = vmul.f32 %v991, %v1118
  %v1124 = vmul.f32 %v996, %v1118
  %v1125 = vmul.f32 %v999, %v1118
  %v1126 = vmul.f32 %v1004, %v1118
  %v1127 = vmul.f32 %v1007, %v1118
  %v1128 = vmul.f32 %v1012, %v1118
  %v1129 = vmul.f32 %v1015, %v1118
  %v1130 = vmul.f32 %v1020, %v1118
  %v1131 = vmul.f32 %v1023, %v1118
  %v1132 = vmul.f32 %v1028, %v1118
  %v1133 = vmul.f32 %v1031, %v1118
  %v1134 = vmul.f32 %v1036, %v1118
  %v1135 = vmul.f32 %v1039, %v1118
  %1136 = vadd.xlane.f32.xlu0 %v1120
  %v1137 = vpop.xlane.xlu0 %1136
  %1138 = vadd.xlane.f32.xlu0 %v1121
  %v1139 = vpop.xlane.xlu0 %1138
  %1140 = vadd.xlane.f32.xlu0 %v1122
  %v1141 = vpop.xlane.xlu0 %1140
  %1142 = vadd.xlane.f32.xlu0 %v1123
  %v1143 = vpop.xlane.xlu0 %1142
  %1144 = vadd.xlane.f32.xlu0 %v1124
  %v1145 = vpop.xlane.xlu0 %1144
  %1146 = vadd.xlane.f32.xlu0 %v1125
  %v1147 = vpop.xlane.xlu0 %1146
  %1148 = vadd.xlane.f32.xlu0 %v1126
  %v1149 = vpop.xlane.xlu0 %1148
  %1150 = vadd.xlane.f32.xlu0 %v1127
  %v1151 = vpop.xlane.xlu0 %1150
  %1152 = vadd.xlane.f32.xlu0 %v1128
  %v1153 = vpop.xlane.xlu0 %1152
  %1154 = vadd.xlane.f32.xlu0 %v1129
  %v1155 = vpop.xlane.xlu0 %1154
  %1156 = vadd.xlane.f32.xlu0 %v1130
  %v1157 = vpop.xlane.xlu0 %1156
  %1158 = vadd.xlane.f32.xlu0 %v1131
  %v1159 = vpop.xlane.xlu0 %1158
  %1160 = vadd.xlane.f32.xlu0 %v1132
  %v1161 = vpop.xlane.xlu0 %1160
  %1162 = vadd.xlane.f32.xlu0 %v1133
  %v1163 = vpop.xlane.xlu0 %1162
  %1164 = vadd.xlane.f32.xlu0 %v1134
  %v1165 = vpop.xlane.xlu0 %1164
  %1166 = vadd.xlane.f32.xlu0 %v1135
  %v1167 = vpop.xlane.xlu0 %1166
  %v1168 = vlaneseq
  %v1169 = vshrl.u32 %v1168, 7
  %v1170 = vsub.s32 0, %v1169
  %v1171 = vrot.slane %v1110, %v1170
  %v1172 = vadd.f32 %v1137, %v1171
  %v1173 = vadd.f32 %v1139, %v1171
  %v1174 = vadd.f32 %v1141, %v1171
  %v1175 = vadd.f32 %v1143, %v1171
  %v1176 = vadd.f32 %v1145, %v1171
  %v1177 = vadd.f32 %v1147, %v1171
  %v1178 = vadd.f32 %v1149, %v1171
  %v1179 = vadd.f32 %v1151, %v1171
  %v1180 = vadd.f32 %v1153, %v1171
  %v1181 = vadd.f32 %v1155, %v1171
  %v1182 = vadd.f32 %v1157, %v1171
  %v1183 = vadd.f32 %v1159, %v1171
  %v1184 = vadd.f32 %v1161, %v1171
  %v1185 = vadd.f32 %v1163, %v1171
  %v1186 = vadd.f32 %v1165, %v1171
  %v1187 = vadd.f32 %v1167, %v1171
  %vm1188 = vcmp.gt.f32.partialorder %v1172, 0.0
  %vm1189 = vcmp.gt.f32.partialorder %v1173, 0.0
  %vm1190 = vcmp.gt.f32.partialorder %v1174, 0.0
  %vm1191 = vcmp.gt.f32.partialorder %v1175, 0.0
  %vm1192 = vcmp.gt.f32.partialorder %v1176, 0.0
  %vm1193 = vcmp.gt.f32.partialorder %v1177, 0.0
  %vm1194 = vcmp.gt.f32.partialorder %v1178, 0.0
  %vm1195 = vcmp.gt.f32.partialorder %v1179, 0.0
  %vm1196 = vcmp.gt.f32.partialorder %v1180, 0.0
  %vm1197 = vcmp.gt.f32.partialorder %v1181, 0.0
  %vm1198 = vcmp.gt.f32.partialorder %v1182, 0.0
  %vm1199 = vcmp.gt.f32.partialorder %v1183, 0.0
  %vm1200 = vcmp.gt.f32.partialorder %v1184, 0.0
  %vm1201 = vcmp.gt.f32.partialorder %v1185, 0.0
  %vm1202 = vcmp.gt.f32.partialorder %v1186, 0.0
  %vm1203 = vcmp.gt.f32.partialorder %v1187, 0.0
  %v1204 = vmul.f32 %v1172, 0.2
  %v1205 = vmul.f32 %v1173, 0.2
  %v1206 = vmul.f32 %v1174, 0.2
  %v1207 = vmul.f32 %v1175, 0.2
  %v1208 = vmul.f32 %v1176, 0.2
  %v1209 = vmul.f32 %v1177, 0.2
  %v1210 = vmul.f32 %v1178, 0.2
  %v1211 = vmul.f32 %v1179, 0.2
  %v1212 = vmul.f32 %v1180, 0.2
  %v1213 = vmul.f32 %v1181, 0.2
  %v1214 = vmul.f32 %v1182, 0.2
  %v1215 = vmul.f32 %v1183, 0.2
  %v1216 = vmul.f32 %v1184, 0.2
  %v1217 = vmul.f32 %v1185, 0.2
  %v1218 = vmul.f32 %v1186, 0.2
  %v1219 = vmul.f32 %v1187, 0.2
  %v1220 = vsel %vm1188, %v1172, %v1204
  %v1221 = vsel %vm1189, %v1173, %v1205
  %v1222 = vsel %vm1190, %v1174, %v1206
  %v1223 = vsel %vm1191, %v1175, %v1207
  %v1224 = vsel %vm1192, %v1176, %v1208
  %v1225 = vsel %vm1193, %v1177, %v1209
  %v1226 = vsel %vm1194, %v1178, %v1210
  %v1227 = vsel %vm1195, %v1179, %v1211
  %v1228 = vsel %vm1196, %v1180, %v1212
  %v1229 = vsel %vm1197, %v1181, %v1213
  %v1230 = vsel %vm1198, %v1182, %v1214
  %v1231 = vsel %vm1199, %v1183, %v1215
  %v1232 = vsel %vm1200, %v1184, %v1216
  %v1233 = vsel %vm1201, %v1185, %v1217
  %v1234 = vsel %vm1202, %v1186, %v1218
  %v1235 = vsel %vm1203, %v1187, %v1219
  %v1236 = vsel %vm87, %v1220, -1e+30
  %v1237 = vsel %vm88, %v1221, -1e+30
  %v1238 = vsel %vm89, %v1222, -1e+30
  %v1239 = vsel %vm90, %v1223, -1e+30
  %v1240 = vsel %vm91, %v1224, -1e+30
  %v1241 = vsel %vm92, %v1225, -1e+30
  %v1242 = vsel %vm93, %v1226, -1e+30
  %v1243 = vsel %vm94, %v1227, -1e+30
  %v1244 = vsel %vm95, %v1228, -1e+30
  %v1245 = vsel %vm96, %v1229, -1e+30
  %v1246 = vsel %vm97, %v1230, -1e+30
  %v1247 = vsel %vm98, %v1231, -1e+30
  %v1248 = vsel %vm99, %v1232, -1e+30
  %v1249 = vsel %vm100, %v1233, -1e+30
  %v1250 = vsel %vm101, %v1234, -1e+30
  %v1251 = vsel %vm102, %v1235, -1e+30
  %1252 = vmax.xlane.f32.xlu0 %v1236
  %v1253 = vpop.xlane.xlu0 %1252
  %1254 = vmax.xlane.f32.xlu0 %v1237
  %v1255 = vpop.xlane.xlu0 %1254
  %1256 = vmax.xlane.f32.xlu0 %v1238
  %v1257 = vpop.xlane.xlu0 %1256
  %1258 = vmax.xlane.f32.xlu0 %v1239
  %v1259 = vpop.xlane.xlu0 %1258
  %1260 = vmax.xlane.f32.xlu0 %v1240
  %v1261 = vpop.xlane.xlu0 %1260
  %1262 = vmax.xlane.f32.xlu0 %v1241
  %v1263 = vpop.xlane.xlu0 %1262
  %1264 = vmax.xlane.f32.xlu0 %v1242
  %v1265 = vpop.xlane.xlu0 %1264
  %1266 = vmax.xlane.f32.xlu0 %v1243
  %v1267 = vpop.xlane.xlu0 %1266
  %1268 = vmax.xlane.f32.xlu0 %v1244
  %v1269 = vpop.xlane.xlu0 %1268
  %1270 = vmax.xlane.f32.xlu0 %v1245
  %v1271 = vpop.xlane.xlu0 %1270
  %1272 = vmax.xlane.f32.xlu0 %v1246
  %v1273 = vpop.xlane.xlu0 %1272
  %1274 = vmax.xlane.f32.xlu0 %v1247
  %v1275 = vpop.xlane.xlu0 %1274
  %1276 = vmax.xlane.f32.xlu0 %v1248
  %v1277 = vpop.xlane.xlu0 %1276
  %1278 = vmax.xlane.f32.xlu0 %v1249
  %v1279 = vpop.xlane.xlu0 %1278
  %1280 = vmax.xlane.f32.xlu0 %v1250
  %v1281 = vpop.xlane.xlu0 %1280
  %1282 = vmax.xlane.f32.xlu0 %v1251
  %v1283 = vpop.xlane.xlu0 %1282
  %v1284 = vsub.f32 %v1236, %v1253
  %v1285 = vsub.f32 %v1237, %v1255
  %v1286 = vsub.f32 %v1238, %v1257
  %v1287 = vsub.f32 %v1239, %v1259
  %v1288 = vsub.f32 %v1240, %v1261
  %v1289 = vsub.f32 %v1241, %v1263
  %v1290 = vsub.f32 %v1242, %v1265
  %v1291 = vsub.f32 %v1243, %v1267
  %v1292 = vsub.f32 %v1244, %v1269
  %v1293 = vsub.f32 %v1245, %v1271
  %v1294 = vsub.f32 %v1246, %v1273
  %v1295 = vsub.f32 %v1247, %v1275
  %v1296 = vsub.f32 %v1248, %v1277
  %v1297 = vsub.f32 %v1249, %v1279
  %v1298 = vsub.f32 %v1250, %v1281
  %v1299 = vsub.f32 %v1251, %v1283
  %v1300 = vmul.f32 %v1284, 1.442695
  %v1301 = vpow.pop %v1300
  %v1302 = vmul.f32 %v1285, 1.442695
  %v1303 = vpow.pop %v1302
  %v1304 = vmul.f32 %v1286, 1.442695
  %v1305 = vpow.pop %v1304
  %v1306 = vmul.f32 %v1287, 1.442695
  %v1307 = vpow.pop %v1306
  %v1308 = vmul.f32 %v1288, 1.442695
  %v1309 = vpow.pop %v1308
  %v1310 = vmul.f32 %v1289, 1.442695
  %v1311 = vpow.pop %v1310
  %v1312 = vmul.f32 %v1290, 1.442695
  %v1313 = vpow.pop %v1312
  %v1314 = vmul.f32 %v1291, 1.442695
  %v1315 = vpow.pop %v1314
  %v1316 = vmul.f32 %v1292, 1.442695
  %v1317 = vpow.pop %v1316
  %v1318 = vmul.f32 %v1293, 1.442695
  %v1319 = vpow.pop %v1318
  %v1320 = vmul.f32 %v1294, 1.442695
  %v1321 = vpow.pop %v1320
  %v1322 = vmul.f32 %v1295, 1.442695
  %v1323 = vpow.pop %v1322
  %v1324 = vmul.f32 %v1296, 1.442695
  %v1325 = vpow.pop %v1324
  %v1326 = vmul.f32 %v1297, 1.442695
  %v1327 = vpow.pop %v1326
  %v1328 = vmul.f32 %v1298, 1.442695
  %v1329 = vpow.pop %v1328
  %v1330 = vmul.f32 %v1299, 1.442695
  %v1331 = vpow.pop %v1330
  %v1332 = vsel %vm87, %v1301, 0.0
  %v1333 = vsel %vm88, %v1303, 0.0
  %v1334 = vsel %vm89, %v1305, 0.0
  %v1335 = vsel %vm90, %v1307, 0.0
  %v1336 = vsel %vm91, %v1309, 0.0
  %v1337 = vsel %vm92, %v1311, 0.0
  %v1338 = vsel %vm93, %v1313, 0.0
  %v1339 = vsel %vm94, %v1315, 0.0
  %v1340 = vsel %vm95, %v1317, 0.0
  %v1341 = vsel %vm96, %v1319, 0.0
  %v1342 = vsel %vm97, %v1321, 0.0
  %v1343 = vsel %vm98, %v1323, 0.0
  %v1344 = vsel %vm99, %v1325, 0.0
  %v1345 = vsel %vm100, %v1327, 0.0
  %v1346 = vsel %vm101, %v1329, 0.0
  %v1347 = vsel %vm102, %v1331, 0.0
  %1348 = vadd.xlane.f32.xlu0 %v1332
  %v1349 = vpop.xlane.xlu0 %1348
  %1350 = vadd.xlane.f32.xlu0 %v1333
  %v1351 = vpop.xlane.xlu0 %1350
  %1352 = vadd.xlane.f32.xlu0 %v1334
  %v1353 = vpop.xlane.xlu0 %1352
  %1354 = vadd.xlane.f32.xlu0 %v1335
  %v1355 = vpop.xlane.xlu0 %1354
  %1356 = vadd.xlane.f32.xlu0 %v1336
  %v1357 = vpop.xlane.xlu0 %1356
  %1358 = vadd.xlane.f32.xlu0 %v1337
  %v1359 = vpop.xlane.xlu0 %1358
  %1360 = vadd.xlane.f32.xlu0 %v1338
  %v1361 = vpop.xlane.xlu0 %1360
  %1362 = vadd.xlane.f32.xlu0 %v1339
  %v1363 = vpop.xlane.xlu0 %1362
  %1364 = vadd.xlane.f32.xlu0 %v1340
  %v1365 = vpop.xlane.xlu0 %1364
  %1366 = vadd.xlane.f32.xlu0 %v1341
  %v1367 = vpop.xlane.xlu0 %1366
  %1368 = vadd.xlane.f32.xlu0 %v1342
  %v1369 = vpop.xlane.xlu0 %1368
  %1370 = vadd.xlane.f32.xlu0 %v1343
  %v1371 = vpop.xlane.xlu0 %1370
  %1372 = vadd.xlane.f32.xlu0 %v1344
  %v1373 = vpop.xlane.xlu0 %1372
  %1374 = vadd.xlane.f32.xlu0 %v1345
  %v1375 = vpop.xlane.xlu0 %1374
  %1376 = vadd.xlane.f32.xlu0 %v1346
  %v1377 = vpop.xlane.xlu0 %1376
  %1378 = vadd.xlane.f32.xlu0 %v1347
  %v1379 = vpop.xlane.xlu0 %1378
  %vm1380 = vcmp.gt.f32.partialorder %v1349, 0.0
  %vm1381 = vcmp.gt.f32.partialorder %v1351, 0.0
  %vm1382 = vcmp.gt.f32.partialorder %v1353, 0.0
  %vm1383 = vcmp.gt.f32.partialorder %v1355, 0.0
  %vm1384 = vcmp.gt.f32.partialorder %v1357, 0.0
  %vm1385 = vcmp.gt.f32.partialorder %v1359, 0.0
  %vm1386 = vcmp.gt.f32.partialorder %v1361, 0.0
  %vm1387 = vcmp.gt.f32.partialorder %v1363, 0.0
  %vm1388 = vcmp.gt.f32.partialorder %v1365, 0.0
  %vm1389 = vcmp.gt.f32.partialorder %v1367, 0.0
  %vm1390 = vcmp.gt.f32.partialorder %v1369, 0.0
  %vm1391 = vcmp.gt.f32.partialorder %v1371, 0.0
  %vm1392 = vcmp.gt.f32.partialorder %v1373, 0.0
  %vm1393 = vcmp.gt.f32.partialorder %v1375, 0.0
  %vm1394 = vcmp.gt.f32.partialorder %v1377, 0.0
  %vm1395 = vcmp.gt.f32.partialorder %v1379, 0.0
  %v1396 = vsel %vm1380, %v1349, 1.0
  %v1397 = vsel %vm1381, %v1351, 1.0
  %v1398 = vsel %vm1382, %v1353, 1.0
  %v1399 = vsel %vm1383, %v1355, 1.0
  %v1400 = vsel %vm1384, %v1357, 1.0
  %v1401 = vsel %vm1385, %v1359, 1.0
  %v1402 = vsel %vm1386, %v1361, 1.0
  %v1403 = vsel %vm1387, %v1363, 1.0
  %v1404 = vsel %vm1388, %v1365, 1.0
  %v1405 = vsel %vm1389, %v1367, 1.0
  %v1406 = vsel %vm1390, %v1369, 1.0
  %v1407 = vsel %vm1391, %v1371, 1.0
  %v1408 = vsel %vm1392, %v1373, 1.0
  %v1409 = vsel %vm1393, %v1375, 1.0
  %v1410 = vsel %vm1394, %v1377, 1.0
  %v1411 = vsel %vm1395, %v1379, 1.0
  %v1412 = vrcp.pop %v1396
  %v1413 = vrcp.pop %v1397
  %v1414 = vrcp.pop %v1398
  %v1415 = vrcp.pop %v1399
  %v1416 = vrcp.pop %v1400
  %v1417 = vrcp.pop %v1401
  %v1418 = vrcp.pop %v1402
  %v1419 = vrcp.pop %v1403
  %v1420 = vrcp.pop %v1404
  %v1421 = vrcp.pop %v1405
  %v1422 = vrcp.pop %v1406
  %v1423 = vrcp.pop %v1407
  %v1424 = vrcp.pop %v1408
  %v1425 = vrcp.pop %v1409
  %v1426 = vrcp.pop %v1410
  %v1427 = vrcp.pop %v1411
  %v1428 = vmul.f32 %v1332, %v1412
  %v1429 = vmul.f32 %v1333, %v1413
  %v1430 = vmul.f32 %v1334, %v1414
  %v1431 = vmul.f32 %v1335, %v1415
  %v1432 = vmul.f32 %v1336, %v1416
  %v1433 = vmul.f32 %v1337, %v1417
  %v1434 = vmul.f32 %v1338, %v1418
  %v1435 = vmul.f32 %v1339, %v1419
  %v1436 = vmul.f32 %v1340, %v1420
  %v1437 = vmul.f32 %v1341, %v1421
  %v1438 = vmul.f32 %v1342, %v1422
  %v1439 = vmul.f32 %v1343, %v1423
  %v1440 = vmul.f32 %v1344, %v1424
  %v1441 = vmul.f32 %v1345, %v1425
  %v1442 = vmul.f32 %v1346, %v1426
  %v1443 = vmul.f32 %v1347, %v1427
  %v1444 = vpack.c.bf16 %v1429, %v1428
  %v1445 = vpack.c.bf16 %v1431, %v1430
  %v1446 = vpack.c.bf16 %v1433, %v1432
  %v1447 = vpack.c.bf16 %v1435, %v1434
  %v1448 = vpack.c.bf16 %v1437, %v1436
  %v1449 = vpack.c.bf16 %v1439, %v1438
  %v1450 = vpack.c.bf16 %v1441, %v1440
  %v1451 = vpack.c.bf16 %v1443, %v1442
  %v1452 = vpack.c.bf16 %v983, %v980
  %v1453 = vpack.c.bf16 %v991, %v988
  %v1454 = vpack.c.bf16 %v999, %v996
  %v1455 = vpack.c.bf16 %v1007, %v1004
  %v1456 = vpack.c.bf16 %v1015, %v1012
  %v1457 = vpack.c.bf16 %v1023, %v1020
  %v1458 = vpack.c.bf16 %v1031, %v1028
  %v1459 = vpack.c.bf16 %v1039, %v1036
  %1460 = vmatprep.subr.bf16.mxu0 0
  %1461 = vmatpush1.bf16.msra.mxu0 %v1452
  %1462 = vmatprep.subr.bf16.mxu0 0
  %1463 = vmatpush1.bf16.msra.mxu0 %v1453
  %1464 = vmatprep.subr.bf16.mxu0 0
  %1465 = vmatpush1.bf16.msra.mxu0 %v1454
  %1466 = vmatprep.subr.bf16.mxu0 0
  %1467 = vmatpush1.bf16.msra.mxu0 %v1455
  %1468 = vmatprep.subr.bf16.mxu0 0
  %1469 = vmatpush1.bf16.msra.mxu0 %v1456
  %1470 = vmatprep.subr.bf16.mxu0 0
  %1471 = vmatpush1.bf16.msra.mxu0 %v1457
  %1472 = vmatprep.subr.bf16.mxu0 0
  %1473 = vmatpush1.bf16.msra.mxu0 %v1458
  %1474 = vmatprep.subr.bf16.mxu0 0
  %1475 = vmatpush1.bf16.msra.mxu0 %v1459
  %1476 = vmatprep.subr.bf16.mxu0 0
  %1477 = vmatpush1.bf16.msra.mxu0 0
  %1478 = vmatprep.subr.bf16.mxu0 0
  %1479 = vmatpush1.bf16.msra.mxu0 0
  %1480 = vmatprep.subr.bf16.mxu0 0
  %1481 = vmatpush1.bf16.msra.mxu0 0
  %1482 = vmatprep.subr.bf16.mxu0 0
  %1483 = vmatpush1.bf16.msra.mxu0 0
  %1484 = vmatprep.subr.bf16.mxu0 0
  %1485 = vmatpush1.bf16.msra.mxu0 0
  %1486 = vmatprep.subr.bf16.mxu0 0
  %1487 = vmatpush1.bf16.msra.mxu0 0
  %1488 = vmatprep.subr.bf16.mxu0 0
  %1489 = vmatpush1.bf16.msra.mxu0 0
  %1490 = vmatprep.subr.bf16.mxu0 0
  %1491 = vmatpush1.bf16.msra.mxu0 0
  %1492 = vmatprep.mubr.bf16.mxu0 0
  %1493 = vmatmul.mubr.bf16.gmra.mrb[0].mxu0 %v1444
  %v1494 = vpop.f32.mrb[0].mxu0
  %v1495 = vadd.f32 0.0, %v1494
  %v1496 = vpop.f32.mrb[0].mxu0
  %v1497 = vpop.f32.mrb[0].mxu0
  %v1498 = vadd.f32 0.0, %v1497
  %v1499 = vpop.f32.mrb[0].mxu0
  %1500 = vmatprep.mubr.bf16.mxu0 0
  %1501 = vmatmul.mubr.bf16.gmra.mrb[0].mxu0 %v1445
  %v1502 = vpop.f32.mrb[0].mxu0
  %v1503 = vadd.f32 0.0, %v1502
  %v1504 = vpop.f32.mrb[0].mxu0
  %v1505 = vpop.f32.mrb[0].mxu0
  %v1506 = vadd.f32 0.0, %v1505
  %v1507 = vpop.f32.mrb[0].mxu0
  %1508 = vmatprep.mubr.bf16.mxu0 0
  %1509 = vmatmul.mubr.bf16.gmra.mrb[0].mxu0 %v1446
  %v1510 = vpop.f32.mrb[0].mxu0
  %v1511 = vadd.f32 0.0, %v1510
  %v1512 = vpop.f32.mrb[0].mxu0
  %v1513 = vpop.f32.mrb[0].mxu0
  %v1514 = vadd.f32 0.0, %v1513
  %v1515 = vpop.f32.mrb[0].mxu0
  %1516 = vmatprep.mubr.bf16.mxu0 0
  %1517 = vmatmul.mubr.bf16.gmra.mrb[0].mxu0 %v1447
  %v1518 = vpop.f32.mrb[0].mxu0
  %v1519 = vadd.f32 0.0, %v1518
  %v1520 = vpop.f32.mrb[0].mxu0
  %v1521 = vpop.f32.mrb[0].mxu0
  %v1522 = vadd.f32 0.0, %v1521
  %v1523 = vpop.f32.mrb[0].mxu0
  %1524 = vmatprep.mubr.bf16.mxu0 0
  %1525 = vmatmul.mubr.bf16.gmra.mrb[0].mxu0 %v1448
  %v1526 = vpop.f32.mrb[0].mxu0
  %v1527 = vadd.f32 0.0, %v1526
  %v1528 = vpop.f32.mrb[0].mxu0
  %v1529 = vpop.f32.mrb[0].mxu0
  %v1530 = vadd.f32 0.0, %v1529
  %v1531 = vpop.f32.mrb[0].mxu0
  %1532 = vmatprep.mubr.bf16.mxu0 0
  %1533 = vmatmul.mubr.bf16.gmra.mrb[0].mxu0 %v1449
  %v1534 = vpop.f32.mrb[0].mxu0
  %v1535 = vadd.f32 0.0, %v1534
  %v1536 = vpop.f32.mrb[0].mxu0
  %v1537 = vpop.f32.mrb[0].mxu0
  %v1538 = vadd.f32 0.0, %v1537
  %v1539 = vpop.f32.mrb[0].mxu0
  %1540 = vmatprep.mubr.bf16.mxu0 0
  %1541 = vmatmul.mubr.bf16.gmra.mrb[0].mxu0 %v1450
  %v1542 = vpop.f32.mrb[0].mxu0
  %v1543 = vadd.f32 0.0, %v1542
  %v1544 = vpop.f32.mrb[0].mxu0
  %v1545 = vpop.f32.mrb[0].mxu0
  %v1546 = vadd.f32 0.0, %v1545
  %v1547 = vpop.f32.mrb[0].mxu0
  %1548 = vmatprep.mubr.bf16.mxu0 0
  %1549 = vmatmul.mubr.bf16.gmra.mrb[0].mxu0 %v1451
  %v1550 = vpop.f32.mrb[0].mxu0
  %v1551 = vadd.f32 0.0, %v1550
  %v1552 = vpop.f32.mrb[0].mxu0
  %v1553 = vpop.f32.mrb[0].mxu0
  %v1554 = vadd.f32 0.0, %v1553
  %v1555 = vpop.f32.mrb[0].mxu0
  %1556 = vdwg.mxu0
  %v1557 = vmax.f32 %v1495, 0.0
  %v1558 = vmax.f32 %v1498, 0.0
  %v1559 = vmax.f32 %v1503, 0.0
  %v1560 = vmax.f32 %v1506, 0.0
  %v1561 = vmax.f32 %v1511, 0.0
  %v1562 = vmax.f32 %v1514, 0.0
  %v1563 = vmax.f32 %v1519, 0.0
  %v1564 = vmax.f32 %v1522, 0.0
  %v1565 = vmax.f32 %v1527, 0.0
  %v1566 = vmax.f32 %v1530, 0.0
  %v1567 = vmax.f32 %v1535, 0.0
  %v1568 = vmax.f32 %v1538, 0.0
  %v1569 = vmax.f32 %v1543, 0.0
  %v1570 = vmax.f32 %v1546, 0.0
  %v1571 = vmax.f32 %v1551, 0.0
  %v1572 = vmax.f32 %v1554, 0.0
  %v1573 = vld [vmem:[%s10] sm:$0x1]
  %vm1574 = vcmp.gt.f32.partialorder %v1573, 0.0
  %v1575 = vsel %vm1574, 1, 0
  %v1576 = vlaneseq
  %v1577 = vshrl.u32 %v1576, 7
  %v1578 = vsub.s32 0, %v1577
  %v1579 = vrot.slane %v1575, %v1578
  %vm1580 = vcmp.eq.s32.totalorder %v1579, 1
  %v1581 = vsel %vm1580, %v1557, -1e+30
  %v1582 = vsel %vm1580, %v1558, -1e+30
  %v1583 = vsel %vm1580, %v1559, -1e+30
  %v1584 = vsel %vm1580, %v1560, -1e+30
  %v1585 = vsel %vm1580, %v1561, -1e+30
  %v1586 = vsel %vm1580, %v1562, -1e+30
  %v1587 = vsel %vm1580, %v1563, -1e+30
  %v1588 = vsel %vm1580, %v1564, -1e+30
  %v1589 = vsel %vm1580, %v1565, -1e+30
  %v1590 = vsel %vm1580, %v1566, -1e+30
  %v1591 = vsel %vm1580, %v1567, -1e+30
  %v1592 = vsel %vm1580, %v1568, -1e+30
  %v1593 = vsel %vm1580, %v1569, -1e+30
  %v1594 = vsel %vm1580, %v1570, -1e+30
  %v1595 = vsel %vm1580, %v1571, -1e+30
  %v1596 = vsel %vm1580, %v1572, -1e+30
  %1597 = vmax.xlane.f32.xlu0 %v1581
  %v1598 = vpop.xlane.xlu0 %1597
  %1599 = vmax.xlane.f32.xlu0 %v1582
  %v1600 = vpop.xlane.xlu0 %1599
  %1601 = vmax.xlane.f32.xlu0 %v1583
  %v1602 = vpop.xlane.xlu0 %1601
  %1603 = vmax.xlane.f32.xlu0 %v1584
  %v1604 = vpop.xlane.xlu0 %1603
  %1605 = vmax.xlane.f32.xlu0 %v1585
  %v1606 = vpop.xlane.xlu0 %1605
  %1607 = vmax.xlane.f32.xlu0 %v1586
  %v1608 = vpop.xlane.xlu0 %1607
  %1609 = vmax.xlane.f32.xlu0 %v1587
  %v1610 = vpop.xlane.xlu0 %1609
  %1611 = vmax.xlane.f32.xlu0 %v1588
  %v1612 = vpop.xlane.xlu0 %1611
  %1613 = vmax.xlane.f32.xlu0 %v1589
  %v1614 = vpop.xlane.xlu0 %1613
  %1615 = vmax.xlane.f32.xlu0 %v1590
  %v1616 = vpop.xlane.xlu0 %1615
  %1617 = vmax.xlane.f32.xlu0 %v1591
  %v1618 = vpop.xlane.xlu0 %1617
  %1619 = vmax.xlane.f32.xlu0 %v1592
  %v1620 = vpop.xlane.xlu0 %1619
  %1621 = vmax.xlane.f32.xlu0 %v1593
  %v1622 = vpop.xlane.xlu0 %1621
  %1623 = vmax.xlane.f32.xlu0 %v1594
  %v1624 = vpop.xlane.xlu0 %1623
  %1625 = vmax.xlane.f32.xlu0 %v1595
  %v1626 = vpop.xlane.xlu0 %1625
  %1627 = vmax.xlane.f32.xlu0 %v1596
  %v1628 = vpop.xlane.xlu0 %1627
  %v1629 = vsub.f32 %v1581, %v1598
  %v1630 = vsub.f32 %v1582, %v1600
  %v1631 = vsub.f32 %v1583, %v1602
  %v1632 = vsub.f32 %v1584, %v1604
  %v1633 = vsub.f32 %v1585, %v1606
  %v1634 = vsub.f32 %v1586, %v1608
  %v1635 = vsub.f32 %v1587, %v1610
  %v1636 = vsub.f32 %v1588, %v1612
  %v1637 = vsub.f32 %v1589, %v1614
  %v1638 = vsub.f32 %v1590, %v1616
  %v1639 = vsub.f32 %v1591, %v1618
  %v1640 = vsub.f32 %v1592, %v1620
  %v1641 = vsub.f32 %v1593, %v1622
  %v1642 = vsub.f32 %v1594, %v1624
  %v1643 = vsub.f32 %v1595, %v1626
  %v1644 = vsub.f32 %v1596, %v1628
  %v1645 = vmul.f32 %v1629, 1.442695
  %v1646 = vpow.pop %v1645
  %v1647 = vmul.f32 %v1630, 1.442695
  %v1648 = vpow.pop %v1647
  %v1649 = vmul.f32 %v1631, 1.442695
  %v1650 = vpow.pop %v1649
  %v1651 = vmul.f32 %v1632, 1.442695
  %v1652 = vpow.pop %v1651
  %v1653 = vmul.f32 %v1633, 1.442695
  %v1654 = vpow.pop %v1653
  %v1655 = vmul.f32 %v1634, 1.442695
  %v1656 = vpow.pop %v1655
  %v1657 = vmul.f32 %v1635, 1.442695
  %v1658 = vpow.pop %v1657
  %v1659 = vmul.f32 %v1636, 1.442695
  %v1660 = vpow.pop %v1659
  %v1661 = vmul.f32 %v1637, 1.442695
  %v1662 = vpow.pop %v1661
  %v1663 = vmul.f32 %v1638, 1.442695
  %v1664 = vpow.pop %v1663
  %v1665 = vmul.f32 %v1639, 1.442695
  %v1666 = vpow.pop %v1665
  %v1667 = vmul.f32 %v1640, 1.442695
  %v1668 = vpow.pop %v1667
  %v1669 = vmul.f32 %v1641, 1.442695
  %v1670 = vpow.pop %v1669
  %v1671 = vmul.f32 %v1642, 1.442695
  %v1672 = vpow.pop %v1671
  %v1673 = vmul.f32 %v1643, 1.442695
  %v1674 = vpow.pop %v1673
  %v1675 = vmul.f32 %v1644, 1.442695
  %v1676 = vpow.pop %v1675
  %v1677 = vsel %vm1580, %v1646, 0.0
  %v1678 = vsel %vm1580, %v1648, 0.0
  %v1679 = vsel %vm1580, %v1650, 0.0
  %v1680 = vsel %vm1580, %v1652, 0.0
  %v1681 = vsel %vm1580, %v1654, 0.0
  %v1682 = vsel %vm1580, %v1656, 0.0
  %v1683 = vsel %vm1580, %v1658, 0.0
  %v1684 = vsel %vm1580, %v1660, 0.0
  %v1685 = vsel %vm1580, %v1662, 0.0
  %v1686 = vsel %vm1580, %v1664, 0.0
  %v1687 = vsel %vm1580, %v1666, 0.0
  %v1688 = vsel %vm1580, %v1668, 0.0
  %v1689 = vsel %vm1580, %v1670, 0.0
  %v1690 = vsel %vm1580, %v1672, 0.0
  %v1691 = vsel %vm1580, %v1674, 0.0
  %v1692 = vsel %vm1580, %v1676, 0.0
  %1693 = vadd.xlane.f32.xlu0 %v1677
  %v1694 = vpop.xlane.xlu0 %1693
  %1695 = vadd.xlane.f32.xlu0 %v1678
  %v1696 = vpop.xlane.xlu0 %1695
  %1697 = vadd.xlane.f32.xlu0 %v1679
  %v1698 = vpop.xlane.xlu0 %1697
  %1699 = vadd.xlane.f32.xlu0 %v1680
  %v1700 = vpop.xlane.xlu0 %1699
  %1701 = vadd.xlane.f32.xlu0 %v1681
  %v1702 = vpop.xlane.xlu0 %1701
  %1703 = vadd.xlane.f32.xlu0 %v1682
  %v1704 = vpop.xlane.xlu0 %1703
  %1705 = vadd.xlane.f32.xlu0 %v1683
  %v1706 = vpop.xlane.xlu0 %1705
  %1707 = vadd.xlane.f32.xlu0 %v1684
  %v1708 = vpop.xlane.xlu0 %1707
  %1709 = vadd.xlane.f32.xlu0 %v1685
  %v1710 = vpop.xlane.xlu0 %1709
  %1711 = vadd.xlane.f32.xlu0 %v1686
  %v1712 = vpop.xlane.xlu0 %1711
  %1713 = vadd.xlane.f32.xlu0 %v1687
  %v1714 = vpop.xlane.xlu0 %1713
  %1715 = vadd.xlane.f32.xlu0 %v1688
  %v1716 = vpop.xlane.xlu0 %1715
  %1717 = vadd.xlane.f32.xlu0 %v1689
  %v1718 = vpop.xlane.xlu0 %1717
  %1719 = vadd.xlane.f32.xlu0 %v1690
  %v1720 = vpop.xlane.xlu0 %1719
  %1721 = vadd.xlane.f32.xlu0 %v1691
  %v1722 = vpop.xlane.xlu0 %1721
  %1723 = vadd.xlane.f32.xlu0 %v1692
  %v1724 = vpop.xlane.xlu0 %1723
  %v1725 = vlog2.pop %v1694
  %v1726 = vmul.f32 %v1725, 0.6931472
  %v1727 = vlog2.pop %v1696
  %v1728 = vmul.f32 %v1727, 0.6931472
  %v1729 = vlog2.pop %v1698
  %v1730 = vmul.f32 %v1729, 0.6931472
  %v1731 = vlog2.pop %v1700
  %v1732 = vmul.f32 %v1731, 0.6931472
  %v1733 = vlog2.pop %v1702
  %v1734 = vmul.f32 %v1733, 0.6931472
  %v1735 = vlog2.pop %v1704
  %v1736 = vmul.f32 %v1735, 0.6931472
  %v1737 = vlog2.pop %v1706
  %v1738 = vmul.f32 %v1737, 0.6931472
  %v1739 = vlog2.pop %v1708
  %v1740 = vmul.f32 %v1739, 0.6931472
  %v1741 = vlog2.pop %v1710
  %v1742 = vmul.f32 %v1741, 0.6931472
  %v1743 = vlog2.pop %v1712
  %v1744 = vmul.f32 %v1743, 0.6931472
  %v1745 = vlog2.pop %v1714
  %v1746 = vmul.f32 %v1745, 0.6931472
  %v1747 = vlog2.pop %v1716
  %v1748 = vmul.f32 %v1747, 0.6931472
  %v1749 = vlog2.pop %v1718
  %v1750 = vmul.f32 %v1749, 0.6931472
  %v1751 = vlog2.pop %v1720
  %v1752 = vmul.f32 %v1751, 0.6931472
  %v1753 = vlog2.pop %v1722
  %v1754 = vmul.f32 %v1753, 0.6931472
  %v1755 = vlog2.pop %v1724
  %v1756 = vmul.f32 %v1755, 0.6931472
  %v1757 = vadd.f32 %v1598, %v1726
  %v1758 = vadd.f32 %v1600, %v1728
  %v1759 = vadd.f32 %v1602, %v1730
  %v1760 = vadd.f32 %v1604, %v1732
  %v1761 = vadd.f32 %v1606, %v1734
  %v1762 = vadd.f32 %v1608, %v1736
  %v1763 = vadd.f32 %v1610, %v1738
  %v1764 = vadd.f32 %v1612, %v1740
  %v1765 = vadd.f32 %v1614, %v1742
  %v1766 = vadd.f32 %v1616, %v1744
  %v1767 = vadd.f32 %v1618, %v1746
  %v1768 = vadd.f32 %v1620, %v1748
  %v1769 = vadd.f32 %v1622, %v1750
  %v1770 = vadd.f32 %v1624, %v1752
  %v1771 = vadd.f32 %v1626, %v1754
  %v1772 = vadd.f32 %v1628, %v1756
  %v1773 = vsub.f32 %v1581, %v1757
  %v1774 = vsub.f32 %v1582, %v1758
  %v1775 = vsub.f32 %v1583, %v1759
  %v1776 = vsub.f32 %v1584, %v1760
  %v1777 = vsub.f32 %v1585, %v1761
  %v1778 = vsub.f32 %v1586, %v1762
  %v1779 = vsub.f32 %v1587, %v1763
  %v1780 = vsub.f32 %v1588, %v1764
  %v1781 = vsub.f32 %v1589, %v1765
  %v1782 = vsub.f32 %v1590, %v1766
  %v1783 = vsub.f32 %v1591, %v1767
  %v1784 = vsub.f32 %v1592, %v1768
  %v1785 = vsub.f32 %v1593, %v1769
  %v1786 = vsub.f32 %v1594, %v1770
  %v1787 = vsub.f32 %v1595, %v1771
  %v1788 = vsub.f32 %v1596, %v1772
  %v1789 = vsel %vm1580, %v1773, 0.0
  %v1790 = vsel %vm1580, %v1774, 0.0
  %v1791 = vsel %vm1580, %v1775, 0.0
  %v1792 = vsel %vm1580, %v1776, 0.0
  %v1793 = vsel %vm1580, %v1777, 0.0
  %v1794 = vsel %vm1580, %v1778, 0.0
  %v1795 = vsel %vm1580, %v1779, 0.0
  %v1796 = vsel %vm1580, %v1780, 0.0
  %v1797 = vsel %vm1580, %v1781, 0.0
  %v1798 = vsel %vm1580, %v1782, 0.0
  %v1799 = vsel %vm1580, %v1783, 0.0
  %v1800 = vsel %vm1580, %v1784, 0.0
  %v1801 = vsel %vm1580, %v1785, 0.0
  %v1802 = vsel %vm1580, %v1786, 0.0
  %v1803 = vsel %vm1580, %v1787, 0.0
  %v1804 = vsel %vm1580, %v1788, 0.0
  %1805 = vst [vmem:[%s11] sm:$0xff] %v1789
  %1806 = vst [vmem:[%s11 + $0x8] sm:$0xff] %v1790
  %1807 = vst [vmem:[%s11 + $0x10] sm:$0xff] %v1791
  %1808 = vst [vmem:[%s11 + $0x18] sm:$0xff] %v1792
  %1809 = vst [vmem:[%s11 + $0x20] sm:$0xff] %v1793
  %1810 = vst [vmem:[%s11 + $0x28] sm:$0xff] %v1794
  %1811 = vst [vmem:[%s11 + $0x30] sm:$0xff] %v1795
  %1812 = vst [vmem:[%s11 + $0x38] sm:$0xff] %v1796
  %1813 = vst [vmem:[%s11 + $0x40] sm:$0xff] %v1797
  %1814 = vst [vmem:[%s11 + $0x48] sm:$0xff] %v1798
  %1815 = vst [vmem:[%s11 + $0x50] sm:$0xff] %v1799
  %1816 = vst [vmem:[%s11 + $0x58] sm:$0xff] %v1800
  %1817 = vst [vmem:[%s11 + $0x60] sm:$0xff] %v1801
  %1818 = vst [vmem:[%s11 + $0x68] sm:$0xff] %v1802
  %1819 = vst [vmem:[%s11 + $0x70] sm:$0xff] %v1803
  %1820 = vst [vmem:[%s11 + $0x78] sm:$0xff] %v1804
  // Predicated region
  $region46: #{han_forward.1} parent=0 // pred_check
    _
  $region47: #{han_forward.1} parent=0 // pred_check_branch
    %1822 = sbr.rel (0) target = $region49
  $region48: #{han_forward.1} parent=0 // pred_region
    _
  $region49: #{han_forward.1} parent=0 // pred_fallthru
    _
  // Predicated region
  $region50: #{han_forward.1} parent=0 // pred_check
    _
  $region51: #{han_forward.1} parent=0 // pred_check_branch
    %1824 = sbr.rel (0) target = $region53
  $region52: #{han_forward.1} parent=0 // pred_region
    _
  $region53: #{han_forward.1} parent=0 // pred_fallthru
    _

</llo_original>
